<compile_context>
chip_gen: v6e
topology: v6e:2x2x1
jax: 0.10.0
libtpu: 0.0.40
codegen_flags: <defaults>
</compile_context>

<pallas_src>
import functools

import jax
import jax.numpy as jnp
from jax.experimental import pallas as pl
from jax.experimental.pallas import tpu as pltpu


def _simloss_kernel(rows_ref, cols_ref, wts_ref,                   # scalar prefetch (SMEM)
                    f_row_ref, ft_col_ref, l_row_ref, lt_col_ref,  # VMEM tiles (bf16)
                    out_ref,                                       # (1, 8, 128) f32 VMEM
                    acc_ref,                                       # (1, tile)   f32 VMEM
                    *, steps_per_core):
    del rows_ref, cols_ref                         # only used by the index maps
    c = pl.program_id(0)                           # schedule half ("parallel")
    t = pl.program_id(1)                           # step in half  ("arbitrary")

    @pl.when(t == 0)
    def _init():
        acc_ref[...] = jnp.zeros_like(acc_ref)

    # theta tile = feats[bi] @ feats[bj].T / 2 ; both MXU operands lane-dense
    # (RHS pre-transposed in the wrapper), bf16 inputs with f32 accumulation.
    theta = jnp.dot(f_row_ref[...], ft_col_ref[...],
                    preferred_element_type=jnp.float32) * 0.5

    # labels Gram; 0/1 multi-hot labels are exact in bf16, so (lgram > 0)
    # reproduces the reference sim matrix exactly.
    lgram = jnp.dot(l_row_ref[...], lt_col_ref[...],
                    preferred_element_type=jnp.float32)

    # per-pair loss: softplus(-|theta|) + relu(theta) - sim * theta
    # (sim * theta folded into a single select).
    loss = (jnp.log1p(jnp.exp(-jnp.abs(theta)))
            + jnp.maximum(theta, 0.0)
            - jnp.where(lgram > 0.0, theta, 0.0))

    # Reduce along sublanes before accumulating (cheap VPU adds, ~tile/8 x less
    # accumulator load/store traffic), then apply the symmetry / dummy weight
    # (1 = diagonal block, 2 = off-diagonal stands for its mirror, 0 = dummy).
    w = wts_ref[c * steps_per_core + t].astype(jnp.float32)
    acc_ref[...] += jnp.sum(loss, axis=0, keepdims=True) * w

    @pl.when(t == steps_per_core - 1)
    def _finalize():
        out_ref[...] = jnp.broadcast_to(jnp.sum(acc_ref[...]), out_ref.shape)


def sim_loss(feats, labels, *, tile=256, num_cores=2):
    """feats: (N, D) float32; labels: (N, C) float32 0/1 multi-hot.

    NOTE: sim is computed from a bf16 labels Gram -- exact for 0/1 multi-hot
    labels; soft or negative-valued labels are not supported.
    """
    N, D = feats.shape
    _, C = labels.shape

    # Tile must be a multiple of 128 (lane dim of the transposed operands);
    # don't use a tile wildly larger than N.
    tile = ((max(tile, 128) + 127) // 128) * 128
    tile = min(tile, ((N + 127) // 128) * 128)

    n_pad = ((N + tile - 1) // tile) * tile
    if n_pad != N:
        feats = jnp.pad(feats, ((0, n_pad - N), (0, 0)))
        labels = jnp.pad(labels, ((0, n_pad - N), (0, 0)))

    # bf16 operands (f32 MXU accumulation in-kernel); pre-transposed copies so
    # both matmul operands arrive lane-dense (no in-kernel transpose).
    f = feats.astype(jnp.bfloat16)
    l = labels.astype(jnp.bfloat16)
    ft = f.T                        # (D, n_pad)
    lt = l.T                        # (C, n_pad)

    # Upper-triangular block schedule, row-block slowly varying (so Pallas can
    # skip re-fetching unchanged row tiles), split into `num_cores` contiguous
    # halves; slots padded with zero-weight dummy steps.
    nb = n_pad // tile
    blocks = [(i, j) for i in range(nb) for j in range(i, nb)]
    n_blocks = len(blocks)
    spc = -(-n_blocks // num_cores)             # steps per core (ceil)
    n_slots = num_cores * spc
    rows = [0] * n_slots
    cols = [0] * n_slots
    wts = [0] * n_slots                         # 0 => dummy step
    for s, (i, j) in enumerate(blocks):
        rows[s] = i
        cols[s] = j
        wts[s] = 1 if i == j else 2
    rows = jnp.asarray(rows, dtype=jnp.int32)
    cols = jnp.asarray(cols, dtype=jnp.int32)
    wts = jnp.asarray(wts, dtype=jnp.int32)

    kernel = functools.partial(_simloss_kernel, steps_per_core=spc)

    grid_spec = pltpu.PrefetchScalarGridSpec(
        num_scalar_prefetch=3,
        grid=(num_cores, spc),
        in_specs=[
            pl.BlockSpec((tile, D), lambda c, t, r, cc, w: (r[c * spc + t], 0)),
            pl.BlockSpec((D, tile), lambda c, t, r, cc, w: (0, cc[c * spc + t])),
            pl.BlockSpec((tile, C), lambda c, t, r, cc, w: (r[c * spc + t], 0)),
            pl.BlockSpec((C, tile), lambda c, t, r, cc, w: (0, cc[c * spc + t])),
        ],
        out_specs=pl.BlockSpec((1, 8, 128), lambda c, t, r, cc, w: (c, 0, 0)),
        scratch_shapes=[pltpu.VMEM((1, tile), jnp.float32)],
    )

    elems = n_blocks * tile * tile
    out = pl.pallas_call(
        kernel,
        out_shape=jax.ShapeDtypeStruct((num_cores, 8, 128), jnp.float32),
        grid_spec=grid_spec,
        compiler_params=pltpu.CompilerParams(
            dimension_semantics=("parallel", "arbitrary"),
            vmem_limit_bytes=32 * 1024 * 1024,
        ),
        cost_estimate=pl.CostEstimate(
            flops=int(2 * elems * (D + C) + 10 * elems),
            transcendentals=int(2 * elems),
            bytes_accessed=int(2 * nb * 2 * n_pad * (D + C)
                               + num_cores * 8 * 128 * 4),
        ),
    )(rows, cols, wts, f, ft, l, lt)

    # Sum per-core partials; every padded pair (zero feats/labels rows) added
    # exactly ln(2) with sim = 0 -- subtract analytically, then mean over the
    # true N*N pairs.
    total = jnp.sum(out[:, 0, 0])
    ln2 = jnp.log(jnp.float32(2.0))
    total = total - ln2 * jnp.float32(n_pad * n_pad - N * N)
    return total / jnp.float32(N * N)


def sim_loss_ref(feats, labels):
    """Pure-JAX reference matching the PyTorch forward exactly."""
    theta = feats @ feats.T / 2
    sim = (labels @ labels.T > 0).astype(jnp.float32)
    return jnp.mean(jnp.log1p(jnp.exp(-jnp.abs(theta)))
                    + jnp.maximum(theta, 0.0) - sim * theta)


if __name__ == "__main__":
    key = jax.random.PRNGKey(0)
    k1, k2 = jax.random.split(key)

    # N not a multiple of the tile exercises the analytic padding correction.
    # tile=256 (default): nb=2 -> 3 upper-tri blocks over 2 schedule halves
    # (one zero-weight dummy step).  tile=128: nb=3 -> 6 blocks, 3 per half.
    N, D, C = 300, 32, 16
    feats = jax.random.normal(k1, (N, D), dtype=jnp.float32)
    labels = (jax.random.uniform(k2, (N, C)) > 0.6).astype(jnp.float32)

    ref = sim_loss_ref(feats, labels)

    out = jax.block_until_ready(sim_loss(feats, labels))              # tile=256 path
    assert jnp.allclose(out, ref, rtol=3e-3, atol=3e-3), (out, ref)

    out128 = jax.block_until_ready(sim_loss(feats, labels, tile=128)) # multi-block path
    assert jnp.allclose(out128, ref, rtol=3e-3, atol=3e-3), (out128, ref)

    print("KERNEL_OK")
</pallas_src>

<mosaic_0001>
module attributes {stable_mosaic.version = 11 : i64} {
  func.func @_simloss_kernel(%arg0: i32, %arg1: i32, %arg2: memref<4xi32, #tpu.memory_space<smem>>, %arg3: memref<4xi32, #tpu.memory_space<smem>>, %arg4: memref<4xi32, #tpu.memory_space<smem>>, %arg5: memref<256x32xbf16, #tpu.memory_space<vmem>>, %arg6: memref<32x256xbf16, #tpu.memory_space<vmem>>, %arg7: memref<256x16xbf16, #tpu.memory_space<vmem>>, %arg8: memref<16x256xbf16, #tpu.memory_space<vmem>>, %arg9: memref<1x8x128xf32, #tpu.memory_space<vmem>>, %arg10: memref<1x256xf32, #tpu.memory_space<vmem>>) attributes {dimension_semantics = [#tpu.dimension_semantics<parallel>, #tpu.dimension_semantics<arbitrary>], iteration_bounds = array<i64: 2, 2>, scalar_prefetch = 3 : i64, scratch_operands = 1 : i64, tpu.core_type = #tpu.core_type<tc>, window_params = [{transform_indices = @transform_0, window_bounds = array<i64: 256, 32>}, {transform_indices = @transform_1, window_bounds = array<i64: 32, 256>}, {transform_indices = @transform_2, window_bounds = array<i64: 256, 16>}, {transform_indices = @transform_3, window_bounds = array<i64: 16, 256>}, {transform_indices = @transform_4, window_bounds = array<i64: 1, 8, 128>}]} {
    %c0_i32 = arith.constant 0 : i32
    %0 = arith.cmpi eq, %arg1, %c0_i32 : i32
    %1 = arith.extui %0 : i1 to i32
    %c0_i32_0 = arith.constant 0 : i32
    %2 = arith.cmpi ne, %1, %c0_i32_0 : i32
    scf.if %2 {
      %cst_20 = arith.constant 0.000000e+00 : f32
      %39 = vector.broadcast %cst_20 : f32 to vector<1x256xf32>
      %c0_21 = arith.constant 0 : index
      %c0_22 = arith.constant 0 : index
      %40 = vector.load %arg10[%c0_21, %c0_22] : memref<1x256xf32, #tpu.memory_space<vmem>>, vector<1x256xf32>
      tpu.vector_store %arg10[%c0_21, %c0_22], %39 {strides = array<i32>} : memref<1x256xf32, #tpu.memory_space<vmem>>, vector<1x256xf32>,
    } else {
    }
    %c0 = arith.constant 0 : index
    %c0_1 = arith.constant 0 : index
    %3 = vector.load %arg5[%c0, %c0_1] : memref<256x32xbf16, #tpu.memory_space<vmem>>, vector<256x32xbf16>
    %c0_2 = arith.constant 0 : index
    %c0_3 = arith.constant 0 : index
    %4 = vector.load %arg6[%c0_2, %c0_3] : memref<32x256xbf16, #tpu.memory_space<vmem>>, vector<32x256xbf16>
    %cst = arith.constant dense<0.000000e+00> : vector<256x256xf32>
    %5 = tpu.matmul %3, %4, %cst {dimension_numbers = #tpu.dot_dimension_numbers<[1], [0], [0], [1], [0, 0, 1, 1], [], []>} : vector<256x32xbf16>, vector<32x256xbf16>, vector<256x256xf32> -> vector<256x256xf32>
    %cst_4 = arith.constant 5.000000e-01 : f32
    %6 = vector.broadcast %cst_4 : f32 to vector<256x256xf32>
    %7 = arith.mulf %5, %6 : vector<256x256xf32>
    %c0_5 = arith.constant 0 : index
    %c0_6 = arith.constant 0 : index
    %8 = vector.load %arg7[%c0_5, %c0_6] : memref<256x16xbf16, #tpu.memory_space<vmem>>, vector<256x16xbf16>
    %c0_7 = arith.constant 0 : index
    %c0_8 = arith.constant 0 : index
    %9 = vector.load %arg8[%c0_7, %c0_8] : memref<16x256xbf16, #tpu.memory_space<vmem>>, vector<16x256xbf16>
    %cst_9 = arith.constant dense<0.000000e+00> : vector<256x256xf32>
    %10 = tpu.matmul %8, %9, %cst_9 {dimension_numbers = #tpu.dot_dimension_numbers<[1], [0], [0], [1], [0, 0, 1, 1], [], []>} : vector<256x16xbf16>, vector<16x256xbf16>, vector<256x256xf32> -> vector<256x256xf32>
    %11 = math.absf %7 : vector<256x256xf32>
    %cst_10 = arith.constant 0.000000e+00 : f32
    %12 = vector.broadcast %cst_10 : f32 to vector<256x256xf32>
    %13 = arith.subf %12, %11 : vector<256x256xf32>
    %14 = math.exp %13 : vector<256x256xf32>
    %15 = math.log1p %14 : vector<256x256xf32>
    %cst_11 = arith.constant 0.000000e+00 : f32
    %16 = vector.broadcast %cst_11 : f32 to vector<256x256xf32>
    %17 = arith.maximumf %7, %16 : vector<256x256xf32>
    %18 = arith.addf %15, %17 : vector<256x256xf32>
    %cst_12 = arith.constant 0.000000e+00 : f32
    %19 = vector.broadcast %cst_12 : f32 to vector<256x256xf32>
    %20 = arith.cmpf ogt, %10, %19 : vector<256x256xf32>
    %cst_13 = arith.constant 0.000000e+00 : f32
    %21 = vector.broadcast %cst_13 : f32 to vector<256x256xf32>
    %22 = arith.select %20, %7, %21 : vector<256x256xi1>, vector<256x256xf32>
    %23 = arith.subf %18, %22 : vector<256x256xf32>
    %c2_i32 = arith.constant 2 : i32
    %24 = arith.muli %arg0, %c2_i32 : i32
    %25 = arith.addi %24, %arg1 : i32
    %26 = arith.index_cast %25 : i32 to index
    %27 = memref.load %arg4[%26] : memref<4xi32, #tpu.memory_space<smem>>
    %28 = arith.sitofp %27 : i32 to f32
    %c0_14 = arith.constant 0 : index
    %c0_15 = arith.constant 0 : index
    %29 = vector.load %arg10[%c0_14, %c0_15] : memref<1x256xf32, #tpu.memory_space<vmem>>, vector<1x256xf32>
    %cst_16 = arith.constant dense<0.000000e+00> : vector<256xf32>
    %30 = vector.multi_reduction <add>, %23, %cst_16 [0] : vector<256x256xf32> to vector<256xf32>
    %31 = vector.shape_cast %30 : vector<256xf32> to vector<1x256xf32>
    %32 = vector.broadcast %28 : f32 to vector<1x256xf32>
    %33 = arith.mulf %31, %32 : vector<1x256xf32>
    %34 = arith.addf %29, %33 : vector<1x256xf32>
    %c0_17 = arith.constant 0 : index
    %c0_18 = arith.constant 0 : index
    %35 = vector.load %arg10[%c0_17, %c0_18] : memref<1x256xf32, #tpu.memory_space<vmem>>, vector<1x256xf32>
    tpu.vector_store %arg10[%c0_17, %c0_18], %34 {strides = array<i32>} : memref<1x256xf32, #tpu.memory_space<vmem>>, vector<1x256xf32>,
    %c1_i32 = arith.constant 1 : i32
    %36 = arith.cmpi eq, %arg1, %c1_i32 : i32
    %37 = arith.extui %36 : i1 to i32
    %c0_i32_19 = arith.constant 0 : i32
    %38 = arith.cmpi ne, %37, %c0_i32_19 : i32
    scf.if %38 {
      %c0_20 = arith.constant 0 : index
      %c0_21 = arith.constant 0 : index
      %39 = vector.load %arg10[%c0_20, %c0_21] : memref<1x256xf32, #tpu.memory_space<vmem>>, vector<1x256xf32>
      %40 = vector.shape_cast %39 : vector<1x256xf32> to vector<1x1x256xf32>
      %cst_22 = arith.constant dense<0.000000e+00> : vector<1xf32>
      %41 = vector.multi_reduction <add>, %40, %cst_22 [1, 2] : vector<1x1x256xf32> to vector<1xf32>
      %42 = vector.shape_cast %41 : vector<1xf32> to vector<1x1x1xf32>
      %43 = vector.extract %42[0, 0, 0] : f32 from vector<1x1x1xf32>
      %44 = vector.broadcast %43 : f32 to vector<1x8x128xf32>
      %c0_23 = arith.constant 0 : index
      %c0_24 = arith.constant 0 : index
      %c0_25 = arith.constant 0 : index
      %45 = vector.load %arg9[%c0_23, %c0_24, %c0_25] : memref<1x8x128xf32, #tpu.memory_space<vmem>>, vector<1x8x128xf32>
      tpu.vector_store %arg9[%c0_23, %c0_24, %c0_25], %44 {strides = array<i32>} : memref<1x8x128xf32, #tpu.memory_space<vmem>>, vector<1x8x128xf32>,
    } else {
    }
    return
  }
  func.func @transform_0(%arg0: i32, %arg1: i32, %arg2: memref<4xi32, #tpu.memory_space<smem>>, %arg3: memref<4xi32, #tpu.memory_space<smem>>, %arg4: memref<4xi32, #tpu.memory_space<smem>>) -> (i32, i32) {
    %c2_i32 = arith.constant 2 : i32
    %0 = arith.muli %arg0, %c2_i32 : i32
    %1 = arith.addi %0, %arg1 : i32
    %2 = arith.index_cast %1 : i32 to index
    %3 = memref.load %arg2[%2] : memref<4xi32, #tpu.memory_space<smem>>
    %c0_i32 = arith.constant 0 : i32
    %c0_i32_0 = arith.constant 0 : i32
    return %3, %c0_i32 : i32, i32
  }
  func.func @transform_1(%arg0: i32, %arg1: i32, %arg2: memref<4xi32, #tpu.memory_space<smem>>, %arg3: memref<4xi32, #tpu.memory_space<smem>>, %arg4: memref<4xi32, #tpu.memory_space<smem>>) -> (i32, i32) {
    %c2_i32 = arith.constant 2 : i32
    %0 = arith.muli %arg0, %c2_i32 : i32
    %1 = arith.addi %0, %arg1 : i32
    %2 = arith.index_cast %1 : i32 to index
    %3 = memref.load %arg3[%2] : memref<4xi32, #tpu.memory_space<smem>>
    %c0_i32 = arith.constant 0 : i32
    %c0_i32_0 = arith.constant 0 : i32
    return %c0_i32, %3 : i32, i32
  }
  func.func @transform_2(%arg0: i32, %arg1: i32, %arg2: memref<4xi32, #tpu.memory_space<smem>>, %arg3: memref<4xi32, #tpu.memory_space<smem>>, %arg4: memref<4xi32, #tpu.memory_space<smem>>) -> (i32, i32) {
    %c2_i32 = arith.constant 2 : i32
    %0 = arith.muli %arg0, %c2_i32 : i32
    %1 = arith.addi %0, %arg1 : i32
    %2 = arith.index_cast %1 : i32 to index
    %3 = memref.load %arg2[%2] : memref<4xi32, #tpu.memory_space<smem>>
    %c0_i32 = arith.constant 0 : i32
    %c0_i32_0 = arith.constant 0 : i32
    return %3, %c0_i32 : i32, i32
  }
  func.func @transform_3(%arg0: i32, %arg1: i32, %arg2: memref<4xi32, #tpu.memory_space<smem>>, %arg3: memref<4xi32, #tpu.memory_space<smem>>, %arg4: memref<4xi32, #tpu.memory_space<smem>>) -> (i32, i32) {
    %c2_i32 = arith.constant 2 : i32
    %0 = arith.muli %arg0, %c2_i32 : i32
    %1 = arith.addi %0, %arg1 : i32
    %2 = arith.index_cast %1 : i32 to index
    %3 = memref.load %arg3[%2] : memref<4xi32, #tpu.memory_space<smem>>
    %c0_i32 = arith.constant 0 : i32
    %c0_i32_0 = arith.constant 0 : i32
    return %c0_i32, %3 : i32, i32
  }
  func.func @transform_4(%arg0: i32, %arg1: i32, %arg2: memref<4xi32, #tpu.memory_space<smem>>, %arg3: memref<4xi32, #tpu.memory_space<smem>>, %arg4: memref<4xi32, #tpu.memory_space<smem>>) -> (i32, i32, i32) {
    %c0_i32 = arith.constant 0 : i32
    %c0_i32_0 = arith.constant 0 : i32
    %c0_i32_1 = arith.constant 0 : i32
    return %arg0, %c0_i32, %c0_i32_0 : i32, i32, i32
  }
}

</mosaic_0001>

<llo_original>
// kernel: tpu_custom_call.1
$region0: #{tpu_custom_call.1}
  #allocation0 [shape = 'u32[]', space=smem, size = 0x4, offset = 0x4, fixed_abs, tag = 'smem constant byte address 0x4 - core index']
  #allocation1 [shape = 'u32[144,128]{1,0:T(1,128)}', space=vmem, size = 0x12000, scoped, tag = 'internal scratch']
  #allocation2 [shape = 'f32[1,256]{1,0:T(1,128)}', space=vmem, size = 0x400, scoped, tag = 'scratch operand']
  #allocation3 [shape = 's32[1]{0}', space=sflag, size = 0x4, scoped, tag = 'scoped memory for tpu_custom_call.1']
  #allocation4 [shape = 'u8[512]{0}', space=smem, size = 0x200, scoped, tag = 'prefetched SMEM operand 0']
  #allocation5 [shape = 'u8[512]{0}', space=smem, size = 0x200, scoped, tag = 'prefetched SMEM operand 1']
  #allocation6 [shape = 'u8[512]{0}', space=smem, size = 0x200, scoped, tag = 'prefetched SMEM operand 2']
  %s0 = inlined_call_operand.vmem [shape: s32[4], index: 0, kind: input, shape index: {}]
  %s1 = inlined_call_operand.vmem [shape: s32[4], index: 1, kind: input, shape index: {}]
  %s2 = inlined_call_operand.vmem [shape: s32[4], index: 2, kind: input, shape index: {}]
  %s3 = inlined_call_operand.vmem [shape: bf16[512,32], index: 3, kind: input, shape index: {}]
  %s4 = inlined_call_operand.vmem [shape: bf16[32,512], index: 4, kind: input, shape index: {}]
  %s5 = inlined_call_operand.vmem [shape: bf16[512,16], index: 5, kind: input, shape index: {}]
  %s6 = inlined_call_operand.vmem [shape: bf16[16,512], index: 6, kind: input, shape index: {}]
  %s7 = inlined_call_operand.hbm [shape: f32[2,8,128], index: 7, kind: output, shape index: {}]
  %s8 = sld [smem:[#allocation0]]
  $region133: #{tpu_custom_call.1} parent=0
    _
  %s10 = ssub.s32 1, %s8
  %s11 = scalar_select 0, %s10, %s8
  %s12 = sshll.u32 %s0, 4
  %s13 = int_to_ptr.vmem [resolvable:$true] %s12
  %15 = dma.vmem_to_smem %s13, 16, [#allocation4], [#allocation3]
  %s16 = sshll.u32 %s1, 4
  %s17 = int_to_ptr.vmem [resolvable:$true] %s16
  %19 = dma.vmem_to_smem %s17, 16, [#allocation5], [#allocation3]
  %s20 = sshll.u32 %s2, 4
  %s21 = int_to_ptr.vmem [resolvable:$true] %s20
  %23 = dma.vmem_to_smem %s21, 16, [#allocation6], [#allocation3]
  %24 = dma.done [#allocation3], 48
  %25 = sfence
  $region1: #{tpu_custom_call.1} parent=0
    #allocation7 [shape = 'u8[32768]{0}', space=vmem, size = 0x8000, scoped, tag = 'input window, operand 4']
    #allocation8 [shape = 'u8[16384]{0}', space=vmem, size = 0x4000, scoped, tag = 'input window, operand 6']
    #allocation9 [shape = 'u8[8192]{0}', space=vmem, size = 0x2000, scoped, tag = 'output window, operand 0']
    #allocation10 [shape = 's32[2]{0}', space=sflag, size = 0x8, scoped, tag = 'scoped memory for tpu_custom_call.1']
    %26 = vsyncpa [#allocation10], 0
    %s27 = scalar_lea.sflag [#allocation10], 1
    %28 = vsyncpa %s27, 0
    loop: start=0, step=1, limit=6
    $region2: #{tpu_custom_call.1} parent=1 // loop_pre_header
      _
    $region3: #{tpu_custom_call.1} parent=1 // loop_header
      %s30 = sphi 0, %s34
      %p31 = scmp.ge.s32.totalorder %s30, 6
      %s37 = sphi 0, %s49
      %s38 = sphi 0, %s45
      %s39 = sphi 0, %s37
      %s40 = sphi 0, %s38
      %s41 = sphi 0, %s39
      %s42 = sphi 0, %s40
      %s58 = sphi 0, %s60
      %s61 = sphi 0, %s58
      %s62 = sphi 0, %s61
      %s78 = sphi 0, %s62
      %s90 = sphi 0, %s92
      %s93 = sphi 0, %s90
      %s94 = sphi 0, %s93
      %s110 = sphi 0, %s94
      %s122 = sphi 0, %s124
      %s125 = sphi 0, %s122
      %s126 = sphi 0, %s125
      %s142 = sphi 0, %s126
      %s154 = sphi 0, %s156
      %s157 = sphi 0, %s154
      %s158 = sphi 0, %s157
      %s174 = sphi 0, %s158
      %s180 = sphi 0, %s182
      %s183 = sphi 0, %s180
      %s184 = sphi 0, %s183
      %s200 = sphi 0, %s184
    $region4: #{tpu_custom_call.1} parent=1 // loop_header_branch
      %33 = sbr.rel (%p31) target = $region8
    $region5: #{tpu_custom_call.1} parent=1 // loop_body
      %s35 = ssub.s32 %s30, 1
      %s36 = ssub.s32 %s30, 2
      %s43 = sadd.s32 1, %s38
      %p44 = scmp.ge.s32.totalorder %s43, 2
      %s45 = scalar_select %p44, 0, %s43
      %s46 = sadd.s32 1, %s37
      %s47 = scalar_select %p44, %s46, %s37
      %p48 = scmp.ge.s32.totalorder %s47, 2
      %s49 = scalar_select %p48, 0, %s47
      %s50 = smul.u32 %s37, 2
      %s51 = sadd.s32 %s50, %s38
      %s52 = sld [smem:[#allocation4 + %s51]]
      %s53 = smul.u32 %s49, 2
      %s54 = sadd.s32 %s53, %s45
      %s55 = sld [smem:[#allocation4 + %s54]]
      %s56 = ssub.s32 %s52, %s55
      %p57 = scmp.eq.s32.totalorder %s56, 0
      %s59 = sadd.s32 %s58, 1
      %s60 = scalar_select %p57, %s58, %s59
      %p63 = pneg %p57
      %p64 = scmp.eq.s32.totalorder %s30, 3
      %p65 = por %p63, %p64
      %p66 = scmp.ne.s32.totalorder %s58, %s61
      %p67 = scmp.eq.s32.totalorder %s30, 0
      %p68 = por %p66, %p67
      %p69 = scmp.ne.s32.totalorder %s58, %s61
      %p70 = scmp.eq.s32.totalorder %s35, 3
      %p71 = por %p69, %p70
      %p72 = scmp.ne.s32.totalorder %s61, %s62
      %p73 = scmp.eq.s32.totalorder %s35, 0
      %p74 = por %p72, %p73
      %p75 = scmp.ne.s32.totalorder %s61, %s62
      %p76 = scmp.eq.s32.totalorder %s36, 3
      %p77 = por %p75, %p76
      %p79 = scmp.ne.s32.totalorder %s62, %s78
      %p80 = scmp.eq.s32.totalorder %s36, 0
      %p81 = por %p79, %p80
      %s82 = smul.u32 %s37, 2
      %s83 = sadd.s32 %s82, %s38
      %s84 = sld [smem:[#allocation5 + %s83]]
      %s85 = smul.u32 %s49, 2
      %s86 = sadd.s32 %s85, %s45
      %s87 = sld [smem:[#allocation5 + %s86]]
      %s88 = ssub.s32 %s84, %s87
      %p89 = scmp.eq.s32.totalorder %s88, 0
      %s91 = sadd.s32 %s90, 1
      %s92 = scalar_select %p89, %s90, %s91
      %p95 = pneg %p89
      %p96 = scmp.eq.s32.totalorder %s30, 3
      %p97 = por %p95, %p96
      %p98 = scmp.ne.s32.totalorder %s90, %s93
      %p99 = scmp.eq.s32.totalorder %s30, 0
      %p100 = por %p98, %p99
      %p101 = scmp.ne.s32.totalorder %s90, %s93
      %p102 = scmp.eq.s32.totalorder %s35, 3
      %p103 = por %p101, %p102
      %p104 = scmp.ne.s32.totalorder %s93, %s94
      %p105 = scmp.eq.s32.totalorder %s35, 0
      %p106 = por %p104, %p105
      %p107 = scmp.ne.s32.totalorder %s93, %s94
      %p108 = scmp.eq.s32.totalorder %s36, 3
      %p109 = por %p107, %p108
      %p111 = scmp.ne.s32.totalorder %s94, %s110
      %p112 = scmp.eq.s32.totalorder %s36, 0
      %p113 = por %p111, %p112
      %s114 = smul.u32 %s37, 2
      %s115 = sadd.s32 %s114, %s38
      %s116 = sld [smem:[#allocation4 + %s115]]
      %s117 = smul.u32 %s49, 2
      %s118 = sadd.s32 %s117, %s45
      %s119 = sld [smem:[#allocation4 + %s118]]
      %s120 = ssub.s32 %s116, %s119
      %p121 = scmp.eq.s32.totalorder %s120, 0
      %s123 = sadd.s32 %s122, 1
      %s124 = scalar_select %p121, %s122, %s123
      %p127 = pneg %p121
      %p128 = scmp.eq.s32.totalorder %s30, 3
      %p129 = por %p127, %p128
      %p130 = scmp.ne.s32.totalorder %s122, %s125
      %p131 = scmp.eq.s32.totalorder %s30, 0
      %p132 = por %p130, %p131
      %p133 = scmp.ne.s32.totalorder %s122, %s125
      %p134 = scmp.eq.s32.totalorder %s35, 3
      %p135 = por %p133, %p134
      %p136 = scmp.ne.s32.totalorder %s125, %s126
      %p137 = scmp.eq.s32.totalorder %s35, 0
      %p138 = por %p136, %p137
      %p139 = scmp.ne.s32.totalorder %s125, %s126
      %p140 = scmp.eq.s32.totalorder %s36, 3
      %p141 = por %p139, %p140
      %p143 = scmp.ne.s32.totalorder %s126, %s142
      %p144 = scmp.eq.s32.totalorder %s36, 0
      %p145 = por %p143, %p144
      %s146 = smul.u32 %s37, 2
      %s147 = sadd.s32 %s146, %s38
      %s148 = sld [smem:[#allocation5 + %s147]]
      %s149 = smul.u32 %s49, 2
      %s150 = sadd.s32 %s149, %s45
      %s151 = sld [smem:[#allocation5 + %s150]]
      %s152 = ssub.s32 %s148, %s151
      %p153 = scmp.eq.s32.totalorder %s152, 0
      %s155 = sadd.s32 %s154, 1
      %s156 = scalar_select %p153, %s154, %s155
      %p159 = pneg %p153
      %p160 = scmp.eq.s32.totalorder %s30, 3
      %p161 = por %p159, %p160
      %p162 = scmp.ne.s32.totalorder %s154, %s157
      %p163 = scmp.eq.s32.totalorder %s30, 0
      %p164 = por %p162, %p163
      %p165 = scmp.ne.s32.totalorder %s154, %s157
      %p166 = scmp.eq.s32.totalorder %s35, 3
      %p167 = por %p165, %p166
      %p168 = scmp.ne.s32.totalorder %s157, %s158
      %p169 = scmp.eq.s32.totalorder %s35, 0
      %p170 = por %p168, %p169
      %p171 = scmp.ne.s32.totalorder %s157, %s158
      %p172 = scmp.eq.s32.totalorder %s36, 3
      %p173 = por %p171, %p172
      %p175 = scmp.ne.s32.totalorder %s158, %s174
      %p176 = scmp.eq.s32.totalorder %s36, 0
      %p177 = por %p175, %p176
      %s178 = ssub.s32 %s37, %s49
      %p179 = scmp.eq.s32.totalorder %s178, 0
      %s181 = sadd.s32 %s180, 1
      %s182 = scalar_select %p179, %s180, %s181
      %p185 = pneg %p179
      %p186 = scmp.eq.s32.totalorder %s30, 3
      %p187 = por %p185, %p186
      %p188 = scmp.ne.s32.totalorder %s180, %s183
      %p189 = scmp.eq.s32.totalorder %s30, 0
      %p190 = por %p188, %p189
      %p191 = scmp.ne.s32.totalorder %s180, %s183
      %p192 = scmp.eq.s32.totalorder %s35, 3
      %p193 = por %p191, %p192
      %p194 = scmp.ne.s32.totalorder %s183, %s184
      %p195 = scmp.eq.s32.totalorder %s35, 0
      %p196 = por %p194, %p195
      %p197 = scmp.ne.s32.totalorder %s183, %s184
      %p198 = scmp.eq.s32.totalorder %s36, 3
      %p199 = por %p197, %p198
      %p201 = scmp.ne.s32.totalorder %s184, %s200
      %p202 = scmp.eq.s32.totalorder %s36, 0
      %p203 = por %p201, %p202
      %p204 = scmp.le.s32.totalorder 1, %s30
      %p205 = scmp.lt.s32.totalorder %s30, 5
      %p206 = pnand %p204, %p205
      %p207 = pneg %p206
      // Predicated region
      $region9: #{tpu_custom_call.1} parent=5 // pred_check
        _
      $region10: #{tpu_custom_call.1} parent=5 // pred_check_branch
        %209 = sbr.rel (%p206) target = $region12
      $region11: #{tpu_custom_call.1} parent=5 // pred_region
        %s210 = ssub.s32 %s30, 1
      $region12: #{tpu_custom_call.1} parent=5 // pred_fallthru
        _
      %p211 = scmp.lt.s32.totalorder %s30, 4
      // Predicated region
      $region13: #{tpu_custom_call.1} parent=5 // pred_check
        %p212 = pneg %p211
      $region14: #{tpu_custom_call.1} parent=5 // pred_check_branch
        %214 = sbr.rel (%p212) target = $region16
      $region15: #{tpu_custom_call.1} parent=5 // pred_region
        // Predicated region
        $region17: #{tpu_custom_call.1} parent=15 // pred_check
          %p215 = pneg %p68
        $region18: #{tpu_custom_call.1} parent=15 // pred_check_branch
          %217 = sbr.rel (%p215) target = $region20
        $region19: #{tpu_custom_call.1} parent=15 // pred_region
          %s218 = smul.u32 %s37, 2
          %s219 = sadd.s32 %s218, %s38
          %s220 = sld [smem:[#allocation4 + %s219]]
          %s221 = smul.u32 32, %s220
          %p222 = scmp.lt.s32.totalorder %s221, 63
          %s223 = scalar_select %p222, %s221, 63
          %s224 = smul.addr %s223, 4
          %s225 = scalar_lea.vmem %s3, %s224
          %s226 = smul.u32 %s37, 2
          %s227 = sadd.s32 %s226, %s38
          %s228 = sld [smem:[#allocation4 + %s227]]
          %s229 = smul.u32 32, %s228
        $region20: #{tpu_custom_call.1} parent=15 // pred_fallthru
          _
        // Predicated region
        $region21: #{tpu_custom_call.1} parent=15 // pred_check
          %p230 = pneg %p100
        $region22: #{tpu_custom_call.1} parent=15 // pred_check_branch
          %232 = sbr.rel (%p230) target = $region24
        $region23: #{tpu_custom_call.1} parent=15 // pred_region
          %s233 = sand.u32 %s90, 1
          %s234 = sand.u32 %s90, 1
          %s235 = smul.addr %s234, 32
          %s236 = scalar_lea.vmem [#allocation7], %s235
          %s237 = smul.u32 %s37, 2
          %s238 = sadd.s32 %s237, %s38
          %s239 = sld [smem:[#allocation5 + %s238]]
          %s240 = smul.u32 2, %s239
          %s241 = smul.addr %s240, 4
          %s242 = scalar_lea.vmem %s4, %s241
          // Predicated region
          $region25: #{tpu_custom_call.1} parent=23 // pred_check
            _
          $region26: #{tpu_custom_call.1} parent=23 // pred_check_branch
            %244 = sbr.rel (0) target = $region28
          $region27: #{tpu_custom_call.1} parent=23 // pred_region
            // Predicated region
            $region29: #{tpu_custom_call.1} parent=27 // pred_check
              _
            $region30: #{tpu_custom_call.1} parent=27 // pred_check_branch
              %246 = sbr.rel (0) target = $region32
            $region31: #{tpu_custom_call.1} parent=27 // pred_region
              // Predicated region
              $region44: #{tpu_custom_call.1} parent=31 // pred_check
                _
              $region45: #{tpu_custom_call.1} parent=31 // pred_check_branch
                %268 = sbr.rel (0) target = $region47
              $region46: #{tpu_custom_call.1} parent=31 // pred_region
                loop: start=0, step=1, limit=1
                $region48: #{tpu_custom_call.1} parent=46 // loop_pre_header
                  _
                $region49: #{tpu_custom_call.1} parent=46 // loop_header
                  %s270 = sphi 0, %s274
                  %p271 = scmp.ge.s32.totalorder %s270, 1
                  %s275 = sphi %s242, %s242
                  %s276 = sphi %s236, %s236
                $region50: #{tpu_custom_call.1} parent=46 // loop_header_branch
                  %273 = sbr.rel (%p271) target = $region54
                $region51: #{tpu_custom_call.1} parent=46 // loop_body
                  %v277 = vld [vmem:[%s275] sm:$0xff]
                  %278 = vst [vmem:[%s276] sm:$0xff] %v277
                  %v279 = vld [vmem:[%s275 + $0x10] sm:$0xff]
                  %280 = vst [vmem:[%s276 + $0x8] sm:$0xff] %v279
                  %v281 = vld [vmem:[%s275 + $0x20] sm:$0xff]
                  %282 = vst [vmem:[%s276 + $0x10] sm:$0xff] %v281
                  %v283 = vld [vmem:[%s275 + $0x30] sm:$0xff]
                  %284 = vst [vmem:[%s276 + $0x18] sm:$0xff] %v283
                $region52: #{tpu_custom_call.1} parent=46 // loop_footer
                  %s274 = sadd.s32 1, %s270
                $region53: #{tpu_custom_call.1} parent=46 // loop_footer_branch
                  %269 = sbr.rel target = $region49
                $region54: #{tpu_custom_call.1} parent=46 // loop_exit
                  _
              $region47: #{tpu_custom_call.1} parent=31 // pred_fallthru
                _
              // Predicated region
              $region55: #{tpu_custom_call.1} parent=31 // pred_check
                _
              $region56: #{tpu_custom_call.1} parent=31 // pred_check_branch
                %286 = sbr.rel target = $region58
              $region57: #{tpu_custom_call.1} parent=31 // pred_region
                _
              $region58: #{tpu_custom_call.1} parent=31 // pred_fallthru
                _
            $region32: #{tpu_custom_call.1} parent=27 // pred_fallthru
              _
            // Predicated region
            $region33: #{tpu_custom_call.1} parent=27 // pred_check
              _
            $region34: #{tpu_custom_call.1} parent=27 // pred_check_branch
              %248 = sbr.rel target = $region36
            $region35: #{tpu_custom_call.1} parent=27 // pred_region
              %s250 = ssub.s32 256, 1
              loop: start=0, step=1, limit=1
              $region37: #{tpu_custom_call.1} parent=35 // loop_pre_header
                _
              $region38: #{tpu_custom_call.1} parent=35 // loop_header
                %s252 = sphi 0, %s256
                %p253 = scmp.ge.s32.totalorder %s252, 1
                %s257 = sphi %s242, %s242
                %s258 = sphi %s236, %s236
              $region39: #{tpu_custom_call.1} parent=35 // loop_header_branch
                %255 = sbr.rel (%p253) target = $region43
              $region40: #{tpu_custom_call.1} parent=35 // loop_body
                %v259 = vld [vmem:[%s257] sm:%s250]
                %260 = vst [vmem:[%s258] sm:%s250] %v259
                %v261 = vld [vmem:[%s257 + $0x10] sm:%s250]
                %262 = vst [vmem:[%s258 + $0x8] sm:%s250] %v261
                %v263 = vld [vmem:[%s257 + $0x20] sm:%s250]
                %264 = vst [vmem:[%s258 + $0x10] sm:%s250] %v263
                %v265 = vld [vmem:[%s257 + $0x30] sm:%s250]
                %266 = vst [vmem:[%s258 + $0x18] sm:%s250] %v265
              $region41: #{tpu_custom_call.1} parent=35 // loop_footer
                %s256 = sadd.s32 1, %s252
              $region42: #{tpu_custom_call.1} parent=35 // loop_footer_branch
                %251 = sbr.rel target = $region38
              $region43: #{tpu_custom_call.1} parent=35 // loop_exit
                _
            $region36: #{tpu_custom_call.1} parent=27 // pred_fallthru
              _
          $region28: #{tpu_custom_call.1} parent=23 // pred_fallthru
            _
          %287 = vnop
        $region24: #{tpu_custom_call.1} parent=15 // pred_fallthru
          _
        // Predicated region
        $region59: #{tpu_custom_call.1} parent=15 // pred_check
          %p288 = pneg %p132
        $region60: #{tpu_custom_call.1} parent=15 // pred_check_branch
          %290 = sbr.rel (%p288) target = $region62
        $region61: #{tpu_custom_call.1} parent=15 // pred_region
          %s291 = smul.u32 %s37, 2
          %s292 = sadd.s32 %s291, %s38
          %s293 = sld [smem:[#allocation4 + %s292]]
          %s294 = smul.u32 32, %s293
          %p295 = scmp.lt.s32.totalorder %s294, 63
          %s296 = scalar_select %p295, %s294, 63
          %s297 = smul.addr %s296, 4
          %s298 = scalar_lea.vmem %s5, %s297
          %s299 = smul.u32 %s37, 2
          %s300 = sadd.s32 %s299, %s38
          %s301 = sld [smem:[#allocation4 + %s300]]
          %s302 = smul.u32 32, %s301
        $region62: #{tpu_custom_call.1} parent=15 // pred_fallthru
          _
        // Predicated region
        $region63: #{tpu_custom_call.1} parent=15 // pred_check
          %p303 = pneg %p164
        $region64: #{tpu_custom_call.1} parent=15 // pred_check_branch
          %305 = sbr.rel (%p303) target = $region66
        $region65: #{tpu_custom_call.1} parent=15 // pred_region
          %s306 = sand.u32 %s154, 1
          %s307 = sand.u32 %s154, 1
          %s308 = smul.addr %s307, 16
          %s309 = scalar_lea.vmem [#allocation8], %s308
          %s310 = smul.u32 %s37, 2
          %s311 = sadd.s32 %s310, %s38
          %s312 = sld [smem:[#allocation5 + %s311]]
          %s313 = smul.u32 2, %s312
          %s314 = smul.addr %s313, 4
          %s315 = scalar_lea.vmem %s6, %s314
          // Predicated region
          $region67: #{tpu_custom_call.1} parent=65 // pred_check
            _
          $region68: #{tpu_custom_call.1} parent=65 // pred_check_branch
            %317 = sbr.rel (0) target = $region70
          $region69: #{tpu_custom_call.1} parent=65 // pred_region
            // Predicated region
            $region71: #{tpu_custom_call.1} parent=69 // pred_check
              _
            $region72: #{tpu_custom_call.1} parent=69 // pred_check_branch
              %319 = sbr.rel (0) target = $region74
            $region73: #{tpu_custom_call.1} parent=69 // pred_region
              // Predicated region
              $region86: #{tpu_custom_call.1} parent=73 // pred_check
                _
              $region87: #{tpu_custom_call.1} parent=73 // pred_check_branch
                %337 = sbr.rel (0) target = $region89
              $region88: #{tpu_custom_call.1} parent=73 // pred_region
                loop: start=0, step=1, limit=1
                $region90: #{tpu_custom_call.1} parent=88 // loop_pre_header
                  _
                $region91: #{tpu_custom_call.1} parent=88 // loop_header
                  %s339 = sphi 0, %s343
                  %p340 = scmp.ge.s32.totalorder %s339, 1
                  %s344 = sphi %s315, %s315
                  %s345 = sphi %s309, %s309
                $region92: #{tpu_custom_call.1} parent=88 // loop_header_branch
                  %342 = sbr.rel (%p340) target = $region96
                $region93: #{tpu_custom_call.1} parent=88 // loop_body
                  %v346 = vld [vmem:[%s344] sm:$0xff]
                  %347 = vst [vmem:[%s345] sm:$0xff] %v346
                  %v348 = vld [vmem:[%s344 + $0x10] sm:$0xff]
                  %349 = vst [vmem:[%s345 + $0x8] sm:$0xff] %v348
                $region94: #{tpu_custom_call.1} parent=88 // loop_footer
                  %s343 = sadd.s32 1, %s339
                $region95: #{tpu_custom_call.1} parent=88 // loop_footer_branch
                  %338 = sbr.rel target = $region91
                $region96: #{tpu_custom_call.1} parent=88 // loop_exit
                  _
              $region89: #{tpu_custom_call.1} parent=73 // pred_fallthru
                _
              // Predicated region
              $region97: #{tpu_custom_call.1} parent=73 // pred_check
                _
              $region98: #{tpu_custom_call.1} parent=73 // pred_check_branch
                %351 = sbr.rel target = $region100
              $region99: #{tpu_custom_call.1} parent=73 // pred_region
                _
              $region100: #{tpu_custom_call.1} parent=73 // pred_fallthru
                _
            $region74: #{tpu_custom_call.1} parent=69 // pred_fallthru
              _
            // Predicated region
            $region75: #{tpu_custom_call.1} parent=69 // pred_check
              _
            $region76: #{tpu_custom_call.1} parent=69 // pred_check_branch
              %321 = sbr.rel target = $region78
            $region77: #{tpu_custom_call.1} parent=69 // pred_region
              %s323 = ssub.s32 256, 1
              loop: start=0, step=1, limit=1
              $region79: #{tpu_custom_call.1} parent=77 // loop_pre_header
                _
              $region80: #{tpu_custom_call.1} parent=77 // loop_header
                %s325 = sphi 0, %s329
                %p326 = scmp.ge.s32.totalorder %s325, 1
                %s330 = sphi %s315, %s315
                %s331 = sphi %s309, %s309
              $region81: #{tpu_custom_call.1} parent=77 // loop_header_branch
                %328 = sbr.rel (%p326) target = $region85
              $region82: #{tpu_custom_call.1} parent=77 // loop_body
                %v332 = vld [vmem:[%s330] sm:%s323]
                %333 = vst [vmem:[%s331] sm:%s323] %v332
                %v334 = vld [vmem:[%s330 + $0x10] sm:%s323]
                %335 = vst [vmem:[%s331 + $0x8] sm:%s323] %v334
              $region83: #{tpu_custom_call.1} parent=77 // loop_footer
                %s329 = sadd.s32 1, %s325
              $region84: #{tpu_custom_call.1} parent=77 // loop_footer_branch
                %324 = sbr.rel target = $region80
              $region85: #{tpu_custom_call.1} parent=77 // loop_exit
                _
            $region78: #{tpu_custom_call.1} parent=69 // pred_fallthru
              _
          $region70: #{tpu_custom_call.1} parent=65 // pred_fallthru
            _
          %352 = vnop
        $region66: #{tpu_custom_call.1} parent=15 // pred_fallthru
          _
      $region16: #{tpu_custom_call.1} parent=5 // pred_fallthru
        _
      %p353 = scmp.le.s32.totalorder 1, %s30
      %p354 = scmp.lt.s32.totalorder %s30, 5
      %p355 = pnand %p353, %p354
      %p356 = pneg %p355
      // Predicated region
      $region101: #{tpu_custom_call.1} parent=5 // pred_check
        _
      $region102: #{tpu_custom_call.1} parent=5 // pred_check_branch
        %358 = sbr.rel (%p355) target = $region104
      $region103: #{tpu_custom_call.1} parent=5 // pred_region
        %s359 = ssub.s32 %s30, 1
        %s360 = sand.u32 %s93, 1
        %s361 = sand.u32 %s93, 1
        %s362 = smul.addr %s361, 32
        %s363 = scalar_lea.vmem [#allocation7], %s362
        // Predicated region
        $region105: #{tpu_custom_call.1} parent=103 // pred_check
          %p364 = pneg %p106
        $region106: #{tpu_custom_call.1} parent=103 // pred_check_branch
          %366 = sbr.rel (%p364) target = $region108
        $region107: #{tpu_custom_call.1} parent=103 // pred_region
          _
        $region108: #{tpu_custom_call.1} parent=103 // pred_fallthru
          _
        %s367 = sand.u32 %s157, 1
        %s368 = sand.u32 %s157, 1
        %s369 = smul.addr %s368, 16
        %s370 = scalar_lea.vmem [#allocation8], %s369
        // Predicated region
        $region109: #{tpu_custom_call.1} parent=103 // pred_check
          %p371 = pneg %p170
        $region110: #{tpu_custom_call.1} parent=103 // pred_check_branch
          %373 = sbr.rel (%p371) target = $region112
        $region111: #{tpu_custom_call.1} parent=103 // pred_region
          _
        $region112: #{tpu_custom_call.1} parent=103 // pred_fallthru
          _
        %s374 = smul.u32 %s39, 2
        %s375 = sadd.s32 %s374, %s40
        %s376 = sld [smem:[#allocation4 + %s375]]
        %s377 = smul.u32 32, %s376
        %p378 = scmp.lt.s32.totalorder %s377, 63
        %s379 = scalar_select %p378, %s377, 63
        %s380 = smul.addr %s379, 4
        %s381 = scalar_lea.vmem %s3, %s380
        %p382 = pneg %p74
        %p383 = pneg %p71
        %s384 = sand.u32 %s93, 1
        %s385 = sand.u32 %s93, 1
        %s386 = smul.addr %s385, 32
        %s387 = scalar_lea.vmem [#allocation7], %s386
        %p388 = pneg %p106
        %p389 = pneg %p103
        %s390 = smul.u32 %s39, 2
        %s391 = sadd.s32 %s390, %s40
        %s392 = sld [smem:[#allocation4 + %s391]]
        %s393 = smul.u32 32, %s392
        %p394 = scmp.lt.s32.totalorder %s393, 63
        %s395 = scalar_select %p394, %s393, 63
        %s396 = smul.addr %s395, 4
        %s397 = scalar_lea.vmem %s5, %s396
        %p398 = pneg %p138
        %p399 = pneg %p135
        %s400 = sand.u32 %s157, 1
        %s401 = sand.u32 %s157, 1
        %s402 = smul.addr %s401, 16
        %s403 = scalar_lea.vmem [#allocation8], %s402
        %p404 = pneg %p170
        %p405 = pneg %p167
        %p406 = pneg %p196
        %p407 = pneg %p193
        %s408 = sand.u32 %s183, 1
        %s409 = scalar_lea.sflag [#allocation10], %s408
        %s410 = sand.u32 %s183, 1
        %s411 = smul.addr %s410, 8
        %s412 = scalar_lea.vmem [#allocation9], %s411
        %s413 = smul.u32 %s39, 2
        %s414 = sadd.s32 %s413, %s40
        %s415 = sld [smem:[#allocation4 + %s414]]
        %s416 = smul.u32 32, %s415
        %p417 = scmp.lt.s32.totalorder %s416, 63
        %s418 = scalar_select %p417, %s416, 63
        %s419 = smul.addr %s418, 4
        %s420 = scalar_lea.vmem %s3, %s419
        %s421 = smul.u32 %s39, 2
        %s422 = sadd.s32 %s421, %s40
        %s423 = sld [smem:[#allocation4 + %s422]]
        %s424 = smul.u32 32, %s423
        %s425 = smul.u32 %s39, 2
        %s426 = sadd.s32 %s425, %s40
        %s427 = sld [smem:[#allocation5 + %s426]]
        %s428 = smul.u32 2, %s427
        %s429 = smul.u32 %s39, 2
        %s430 = sadd.s32 %s429, %s40
        %s431 = sld [smem:[#allocation4 + %s430]]
        %s432 = smul.u32 32, %s431
        %p433 = scmp.lt.s32.totalorder %s432, 63
        %s434 = scalar_select %p433, %s432, 63
        %s435 = smul.addr %s434, 4
        %s436 = scalar_lea.vmem %s5, %s435
        %s437 = smul.u32 %s39, 2
        %s438 = sadd.s32 %s437, %s40
        %s439 = sld [smem:[#allocation4 + %s438]]
        %s440 = smul.u32 32, %s439
        %s441 = smul.u32 %s39, 2
        %s442 = sadd.s32 %s441, %s40
        %s443 = sld [smem:[#allocation5 + %s442]]
        %s444 = smul.u32 2, %s443
        %p446 = scmp.eq.s32.totalorder %s40, 0
        // Predicated region
        $region113: #{tpu_custom_call.1} parent=103 // pred_check
          %p447 = pneg %p446
        $region114: #{tpu_custom_call.1} parent=103 // pred_check_branch
          %449 = sbr.rel (%p447) target = $region116
        $region115: #{tpu_custom_call.1} parent=103 // pred_region
          %v450 = vlaneseq
          %vm451 = vcmp.ge.s32.totalorder %v450, 0
          %vm452 = vcmp.lt.s32.totalorder %v450, 256
          %vm453 = vmand %vm451, %vm452
          %454 = vst.msk [vmem:[#allocation2] sm:$0x3] %vm453, 0.0
        $region116: #{tpu_custom_call.1} parent=103 // pred_fallthru
          _
        %v455 = vld [vmem:[%s420] sm:$0xf]
        %v456 = vld [vmem:[%s420 + $0x4] sm:$0xf]
        %v457 = vld [vmem:[%s420 + $0x8] sm:$0xf]
        %v458 = vld [vmem:[%s420 + $0xc] sm:$0xf]
        %v459 = vld [vmem:[%s420 + $0x10] sm:$0xf]
        %v460 = vld [vmem:[%s420 + $0x14] sm:$0xf]
        %v461 = vld [vmem:[%s420 + $0x18] sm:$0xf]
        %v462 = vld [vmem:[%s420 + $0x1c] sm:$0xf]
        %v463 = vld [vmem:[%s420 + $0x20] sm:$0xf]
        %v464 = vld [vmem:[%s420 + $0x24] sm:$0xf]
        %v465 = vld [vmem:[%s420 + $0x28] sm:$0xf]
        %v466 = vld [vmem:[%s420 + $0x2c] sm:$0xf]
        %v467 = vld [vmem:[%s420 + $0x30] sm:$0xf]
        %v468 = vld [vmem:[%s420 + $0x34] sm:$0xf]
        %v469 = vld [vmem:[%s420 + $0x38] sm:$0xf]
        %v470 = vld [vmem:[%s420 + $0x3c] sm:$0xf]
        %v471 = vld [vmem:[%s420 + $0x40] sm:$0xf]
        %v472 = vld [vmem:[%s420 + $0x44] sm:$0xf]
        %v473 = vld [vmem:[%s420 + $0x48] sm:$0xf]
        %v474 = vld [vmem:[%s420 + $0x4c] sm:$0xf]
        %v475 = vld [vmem:[%s420 + $0x50] sm:$0xf]
        %v476 = vld [vmem:[%s420 + $0x54] sm:$0xf]
        %v477 = vld [vmem:[%s420 + $0x58] sm:$0xf]
        %v478 = vld [vmem:[%s420 + $0x5c] sm:$0xf]
        %v479 = vld [vmem:[%s420 + $0x60] sm:$0xf]
        %v480 = vld [vmem:[%s420 + $0x64] sm:$0xf]
        %v481 = vld [vmem:[%s420 + $0x68] sm:$0xf]
        %v482 = vld [vmem:[%s420 + $0x6c] sm:$0xf]
        %v483 = vld [vmem:[%s420 + $0x70] sm:$0xf]
        %v484 = vld [vmem:[%s420 + $0x74] sm:$0xf]
        %v485 = vld [vmem:[%s420 + $0x78] sm:$0xf]
        %v486 = vld [vmem:[%s420 + $0x7c] sm:$0xf]
        %v487 = vld [vmem:[%s363] sm:$0xff]
        %v488 = vld [vmem:[%s363 + $0x8] sm:$0xff]
        %v489 = vld [vmem:[%s363 + $0x10] sm:$0xff]
        %v490 = vld [vmem:[%s363 + $0x18] sm:$0xff]
        %v523 = vunpack.c.l.b16 %v455
        %v524 = vunpack.c.l.b16 %v456
        %v525 = vunpack.c.l.b16 %v457
        %v526 = vunpack.c.l.b16 %v458
        %v527 = vunpack.c.l.b16 %v459
        %v528 = vunpack.c.l.b16 %v460
        %v529 = vunpack.c.l.b16 %v461
        %v530 = vunpack.c.l.b16 %v462
        %v531 = vunpack.c.l.b16 %v463
        %v532 = vunpack.c.l.b16 %v464
        %v533 = vunpack.c.l.b16 %v465
        %v534 = vunpack.c.l.b16 %v466
        %v535 = vunpack.c.l.b16 %v467
        %v536 = vunpack.c.l.b16 %v468
        %v537 = vunpack.c.l.b16 %v469
        %v538 = vunpack.c.l.b16 %v470
        %v539 = vunpack.c.l.b16 %v471
        %v540 = vunpack.c.l.b16 %v472
        %v541 = vunpack.c.l.b16 %v473
        %v542 = vunpack.c.l.b16 %v474
        %v543 = vunpack.c.l.b16 %v475
        %v544 = vunpack.c.l.b16 %v476
        %v545 = vunpack.c.l.b16 %v477
        %v546 = vunpack.c.l.b16 %v478
        %v547 = vunpack.c.l.b16 %v479
        %v548 = vunpack.c.l.b16 %v480
        %v549 = vunpack.c.l.b16 %v481
        %v550 = vunpack.c.l.b16 %v482
        %v551 = vunpack.c.l.b16 %v483
        %v552 = vunpack.c.l.b16 %v484
        %v553 = vunpack.c.l.b16 %v485
        %v554 = vunpack.c.l.b16 %v486
        %v555 = vpack.c.b16 %v524, %v523
        %v556 = vpack.c.b16 %v526, %v525
        %v557 = vpack.c.b16 %v528, %v527
        %v558 = vpack.c.b16 %v530, %v529
        %v559 = vpack.c.b16 %v532, %v531
        %v560 = vpack.c.b16 %v534, %v533
        %v561 = vpack.c.b16 %v536, %v535
        %v562 = vpack.c.b16 %v538, %v537
        %v563 = vpack.c.b16 %v540, %v539
        %v564 = vpack.c.b16 %v542, %v541
        %v565 = vpack.c.b16 %v544, %v543
        %v566 = vpack.c.b16 %v546, %v545
        %v567 = vpack.c.b16 %v548, %v547
        %v568 = vpack.c.b16 %v550, %v549
        %v569 = vpack.c.b16 %v552, %v551
        %v570 = vpack.c.b16 %v554, %v553
        %v575 = vunpack.c.l.b16 %v487
        %v576 = vunpack.c.h.b16 %v487
        %v577 = vunpack.c.l.b16 %v488
        %v578 = vunpack.c.h.b16 %v488
        %v579 = vunpack.c.l.b16 %v489
        %v580 = vunpack.c.h.b16 %v489
        %v581 = vunpack.c.l.b16 %v490
        %v582 = vunpack.c.h.b16 %v490
        %v583 = vpack.c.b16 %v577, %v575
        %v584 = vpack.c.b16 %v578, %v576
        %v585 = vpack.c.b16 %v581, %v579
        %v586 = vpack.c.b16 %v582, %v580
        %vm591 = vcmask 261120
        %v593 = vsel %vm591, %v555, 0
        %v596 = vsel %vm591, %v556, 0
        %v599 = vsel %vm591, %v557, 0
        %v602 = vsel %vm591, %v558, 0
        %v605 = vsel %vm591, %v559, 0
        %v608 = vsel %vm591, %v560, 0
        %v611 = vsel %vm591, %v561, 0
        %v614 = vsel %vm591, %v562, 0
        %v617 = vsel %vm591, %v563, 0
        %v620 = vsel %vm591, %v564, 0
        %v623 = vsel %vm591, %v565, 0
        %v626 = vsel %vm591, %v566, 0
        %v629 = vsel %vm591, %v567, 0
        %v632 = vsel %vm591, %v568, 0
        %v635 = vsel %vm591, %v569, 0
        %v638 = vsel %vm591, %v570, 0
        %640 = vmatprep.subr.bf16.mxu0 0
        %641 = vmatpush1.bf16.msra.mxu0 0
        %642 = vmatprep.subr.bf16.mxu0 0
        %643 = vmatpush1.bf16.msra.mxu0 0
        %644 = vmatprep.subr.bf16.mxu0 0
        %645 = vmatpush1.bf16.msra.mxu0 0
        %646 = vmatprep.subr.bf16.mxu0 0
        %647 = vmatpush1.bf16.msra.mxu0 0
        %648 = vmatprep.subr.bf16.mxu0 0
        %649 = vmatpush1.bf16.msra.mxu0 0
        %650 = vmatprep.subr.bf16.mxu0 0
        %651 = vmatpush1.bf16.msra.mxu0 0
        %652 = vmatprep.subr.bf16.mxu0 %v586
        %653 = vmatpush1.bf16.msra.mxu0 %v585
        %654 = vmatprep.subr.bf16.mxu0 %v584
        %655 = vmatpush1.bf16.msra.mxu0 %v583
        %656 = vmatprep.subr.bf16.mxu0 0
        %657 = vmatpush2.bf16.msra.mxu0 0
        %658 = vmatprep.subr.bf16.mxu0 0
        %659 = vmatpush2.bf16.msra.mxu0 0
        %660 = vmatprep.subr.bf16.mxu0 0
        %661 = vmatpush2.bf16.msra.mxu0 0
        %662 = vmatprep.subr.bf16.mxu0 0
        %663 = vmatpush2.bf16.msra.mxu0 0
        %664 = vmatprep.subr.bf16.mxu0 0
        %665 = vmatpush2.bf16.msra.mxu0 0
        %666 = vmatprep.subr.bf16.mxu0 0
        %667 = vmatpush2.bf16.msra.mxu0 0
        %668 = vmatprep.subr.bf16.mxu0 0
        %669 = vmatpush2.bf16.msra.mxu0 0
        %670 = vmatprep.subr.bf16.mxu0 0
        %671 = vmatpush2.bf16.msra.mxu0 0
        %672 = vmatprep.mubr.bf16.mxu0 0
        %673 = vmatmul.mubr.bf16.gmra.mxu0 %v593
        %v674 = vpop.f32.mrf.mxu0
        %v675 = vadd.f32 0.0, %v674
        %v676 = vpop.f32.mrf.mxu0
        %v677 = vadd.f32 0.0, %v676
        %v678 = vpop.f32.mrf.mxu0
        %v679 = vadd.f32 0.0, %v678
        %v680 = vpop.f32.mrf.mxu0
        %v681 = vadd.f32 0.0, %v680
        %682 = vmatprep.mubr.bf16.mxu0 0
        %683 = vmatmul.mubr.bf16.gmra.mxu0 %v596
        %v684 = vpop.f32.mrf.mxu0
        %v685 = vadd.f32 0.0, %v684
        %v686 = vpop.f32.mrf.mxu0
        %v687 = vadd.f32 0.0, %v686
        %v688 = vpop.f32.mrf.mxu0
        %v689 = vadd.f32 0.0, %v688
        %v690 = vpop.f32.mrf.mxu0
        %v691 = vadd.f32 0.0, %v690
        %692 = vmatprep.mubr.bf16.mxu0 0
        %693 = vmatmul.mubr.bf16.gmra.mxu0 %v599
        %v694 = vpop.f32.mrf.mxu0
        %v695 = vadd.f32 0.0, %v694
        %v696 = vpop.f32.mrf.mxu0
        %v697 = vadd.f32 0.0, %v696
        %v698 = vpop.f32.mrf.mxu0
        %v699 = vadd.f32 0.0, %v698
        %v700 = vpop.f32.mrf.mxu0
        %v701 = vadd.f32 0.0, %v700
        %702 = vmatprep.mubr.bf16.mxu0 0
        %703 = vmatmul.mubr.bf16.gmra.mxu0 %v602
        %v704 = vpop.f32.mrf.mxu0
        %v705 = vadd.f32 0.0, %v704
        %v706 = vpop.f32.mrf.mxu0
        %v707 = vadd.f32 0.0, %v706
        %v708 = vpop.f32.mrf.mxu0
        %v709 = vadd.f32 0.0, %v708
        %v710 = vpop.f32.mrf.mxu0
        %v711 = vadd.f32 0.0, %v710
        %712 = vmatprep.mubr.bf16.mxu0 0
        %713 = vmatmul.mubr.bf16.gmra.mxu0 %v605
        %v714 = vpop.f32.mrf.mxu0
        %v715 = vadd.f32 0.0, %v714
        %v716 = vpop.f32.mrf.mxu0
        %v717 = vadd.f32 0.0, %v716
        %v718 = vpop.f32.mrf.mxu0
        %v719 = vadd.f32 0.0, %v718
        %v720 = vpop.f32.mrf.mxu0
        %v721 = vadd.f32 0.0, %v720
        %722 = vmatprep.mubr.bf16.mxu0 0
        %723 = vmatmul.mubr.bf16.gmra.mxu0 %v608
        %v724 = vpop.f32.mrf.mxu0
        %v725 = vadd.f32 0.0, %v724
        %v726 = vpop.f32.mrf.mxu0
        %v727 = vadd.f32 0.0, %v726
        %v728 = vpop.f32.mrf.mxu0
        %v729 = vadd.f32 0.0, %v728
        %v730 = vpop.f32.mrf.mxu0
        %v731 = vadd.f32 0.0, %v730
        %732 = vmatprep.mubr.bf16.mxu0 0
        %733 = vmatmul.mubr.bf16.gmra.mxu0 %v611
        %v734 = vpop.f32.mrf.mxu0
        %v735 = vadd.f32 0.0, %v734
        %v736 = vpop.f32.mrf.mxu0
        %v737 = vadd.f32 0.0, %v736
        %v738 = vpop.f32.mrf.mxu0
        %v739 = vadd.f32 0.0, %v738
        %v740 = vpop.f32.mrf.mxu0
        %v741 = vadd.f32 0.0, %v740
        %742 = vmatprep.mubr.bf16.mxu0 0
        %743 = vmatmul.mubr.bf16.gmra.mxu0 %v614
        %v744 = vpop.f32.mrf.mxu0
        %v745 = vadd.f32 0.0, %v744
        %v746 = vpop.f32.mrf.mxu0
        %v747 = vadd.f32 0.0, %v746
        %v748 = vpop.f32.mrf.mxu0
        %v749 = vadd.f32 0.0, %v748
        %v750 = vpop.f32.mrf.mxu0
        %v751 = vadd.f32 0.0, %v750
        %752 = vmatprep.mubr.bf16.mxu0 0
        %753 = vmatmul.mubr.bf16.gmra.mxu0 %v617
        %v754 = vpop.f32.mrf.mxu0
        %v755 = vadd.f32 0.0, %v754
        %v756 = vpop.f32.mrf.mxu0
        %v757 = vadd.f32 0.0, %v756
        %v758 = vpop.f32.mrf.mxu0
        %v759 = vadd.f32 0.0, %v758
        %v760 = vpop.f32.mrf.mxu0
        %v761 = vadd.f32 0.0, %v760
        %762 = vmatprep.mubr.bf16.mxu0 0
        %763 = vmatmul.mubr.bf16.gmra.mxu0 %v620
        %v764 = vpop.f32.mrf.mxu0
        %v765 = vadd.f32 0.0, %v764
        %v766 = vpop.f32.mrf.mxu0
        %v767 = vadd.f32 0.0, %v766
        %v768 = vpop.f32.mrf.mxu0
        %v769 = vadd.f32 0.0, %v768
        %v770 = vpop.f32.mrf.mxu0
        %v771 = vadd.f32 0.0, %v770
        %772 = vmatprep.mubr.bf16.mxu0 0
        %773 = vmatmul.mubr.bf16.gmra.mxu0 %v623
        %v774 = vpop.f32.mrf.mxu0
        %v775 = vadd.f32 0.0, %v774
        %v776 = vpop.f32.mrf.mxu0
        %v777 = vadd.f32 0.0, %v776
        %v778 = vpop.f32.mrf.mxu0
        %v779 = vadd.f32 0.0, %v778
        %v780 = vpop.f32.mrf.mxu0
        %v781 = vadd.f32 0.0, %v780
        %782 = vmatprep.mubr.bf16.mxu0 0
        %783 = vmatmul.mubr.bf16.gmra.mxu0 %v626
        %v784 = vpop.f32.mrf.mxu0
        %v785 = vadd.f32 0.0, %v784
        %v786 = vpop.f32.mrf.mxu0
        %v787 = vadd.f32 0.0, %v786
        %v788 = vpop.f32.mrf.mxu0
        %v789 = vadd.f32 0.0, %v788
        %v790 = vpop.f32.mrf.mxu0
        %v791 = vadd.f32 0.0, %v790
        %792 = vmatprep.mubr.bf16.mxu0 0
        %793 = vmatmul.mubr.bf16.gmra.mxu0 %v629
        %v794 = vpop.f32.mrf.mxu0
        %v795 = vadd.f32 0.0, %v794
        %v796 = vpop.f32.mrf.mxu0
        %v797 = vadd.f32 0.0, %v796
        %v798 = vpop.f32.mrf.mxu0
        %v799 = vadd.f32 0.0, %v798
        %v800 = vpop.f32.mrf.mxu0
        %v801 = vadd.f32 0.0, %v800
        %802 = vmatprep.mubr.bf16.mxu0 0
        %803 = vmatmul.mubr.bf16.gmra.mxu0 %v632
        %v804 = vpop.f32.mrf.mxu0
        %v805 = vadd.f32 0.0, %v804
        %v806 = vpop.f32.mrf.mxu0
        %v807 = vadd.f32 0.0, %v806
        %v808 = vpop.f32.mrf.mxu0
        %v809 = vadd.f32 0.0, %v808
        %v810 = vpop.f32.mrf.mxu0
        %v811 = vadd.f32 0.0, %v810
        %812 = vmatprep.mubr.bf16.mxu0 0
        %813 = vmatmul.mubr.bf16.gmra.mxu0 %v635
        %v814 = vpop.f32.mrf.mxu0
        %v815 = vadd.f32 0.0, %v814
        %v816 = vpop.f32.mrf.mxu0
        %v817 = vadd.f32 0.0, %v816
        %v818 = vpop.f32.mrf.mxu0
        %v819 = vadd.f32 0.0, %v818
        %v820 = vpop.f32.mrf.mxu0
        %v821 = vadd.f32 0.0, %v820
        %822 = vmatprep.mubr.bf16.mxu0 0
        %823 = vmatmul.mubr.bf16.gmra.mxu0 %v638
        %v824 = vpop.f32.mrf.mxu0
        %v825 = vadd.f32 0.0, %v824
        %v826 = vpop.f32.mrf.mxu0
        %v827 = vadd.f32 0.0, %v826
        %v828 = vpop.f32.mrf.mxu0
        %v829 = vadd.f32 0.0, %v828
        %v830 = vpop.f32.mrf.mxu0
        %v831 = vadd.f32 0.0, %v830
        %832 = vdwg.mxu0
        %v833 = vmul.f32 %v675, 0.5
        %v834 = vmul.f32 %v677, 0.5
        %v835 = vmul.f32 %v679, 0.5
        %v836 = vmul.f32 %v681, 0.5
        %v837 = vmul.f32 %v685, 0.5
        %v838 = vmul.f32 %v687, 0.5
        %v839 = vmul.f32 %v689, 0.5
        %v840 = vmul.f32 %v691, 0.5
        %v841 = vmul.f32 %v695, 0.5
        %v842 = vmul.f32 %v697, 0.5
        %v843 = vmul.f32 %v699, 0.5
        %v844 = vmul.f32 %v701, 0.5
        %v845 = vmul.f32 %v705, 0.5
        %v846 = vmul.f32 %v707, 0.5
        %v847 = vmul.f32 %v709, 0.5
        %v848 = vmul.f32 %v711, 0.5
        %v849 = vmul.f32 %v715, 0.5
        %v850 = vmul.f32 %v717, 0.5
        %v851 = vmul.f32 %v719, 0.5
        %v852 = vmul.f32 %v721, 0.5
        %v853 = vmul.f32 %v725, 0.5
        %v854 = vmul.f32 %v727, 0.5
        %v855 = vmul.f32 %v729, 0.5
        %v856 = vmul.f32 %v731, 0.5
        %v857 = vmul.f32 %v735, 0.5
        %v858 = vmul.f32 %v737, 0.5
        %v859 = vmul.f32 %v739, 0.5
        %v860 = vmul.f32 %v741, 0.5
        %v861 = vmul.f32 %v745, 0.5
        %v862 = vmul.f32 %v747, 0.5
        %v863 = vmul.f32 %v749, 0.5
        %v864 = vmul.f32 %v751, 0.5
        %v865 = vmul.f32 %v755, 0.5
        %v866 = vmul.f32 %v757, 0.5
        %v867 = vmul.f32 %v759, 0.5
        %v868 = vmul.f32 %v761, 0.5
        %v869 = vmul.f32 %v765, 0.5
        %v870 = vmul.f32 %v767, 0.5
        %v871 = vmul.f32 %v769, 0.5
        %v872 = vmul.f32 %v771, 0.5
        %v873 = vmul.f32 %v775, 0.5
        %v874 = vmul.f32 %v777, 0.5
        %v875 = vmul.f32 %v779, 0.5
        %v876 = vmul.f32 %v781, 0.5
        %v877 = vmul.f32 %v785, 0.5
        %v878 = vmul.f32 %v787, 0.5
        %v879 = vmul.f32 %v789, 0.5
        %v880 = vmul.f32 %v791, 0.5
        %v881 = vmul.f32 %v795, 0.5
        %v882 = vmul.f32 %v797, 0.5
        %v883 = vmul.f32 %v799, 0.5
        %v884 = vmul.f32 %v801, 0.5
        %v885 = vmul.f32 %v805, 0.5
        %v886 = vmul.f32 %v807, 0.5
        %v887 = vmul.f32 %v809, 0.5
        %v888 = vmul.f32 %v811, 0.5
        %v889 = vmul.f32 %v815, 0.5
        %v890 = vmul.f32 %v817, 0.5
        %v891 = vmul.f32 %v819, 0.5
        %v892 = vmul.f32 %v821, 0.5
        %v893 = vmul.f32 %v825, 0.5
        %v894 = vmul.f32 %v827, 0.5
        %v895 = vmul.f32 %v829, 0.5
        %v896 = vmul.f32 %v831, 0.5
        %v897 = vld [vmem:[%s436] sm:$0xf]
        %v898 = vld [vmem:[%s436 + $0x4] sm:$0xf]
        %v899 = vld [vmem:[%s436 + $0x8] sm:$0xf]
        %v900 = vld [vmem:[%s436 + $0xc] sm:$0xf]
        %v901 = vld [vmem:[%s436 + $0x10] sm:$0xf]
        %v902 = vld [vmem:[%s436 + $0x14] sm:$0xf]
        %v903 = vld [vmem:[%s436 + $0x18] sm:$0xf]
        %v904 = vld [vmem:[%s436 + $0x1c] sm:$0xf]
        %v905 = vld [vmem:[%s436 + $0x20] sm:$0xf]
        %v906 = vld [vmem:[%s436 + $0x24] sm:$0xf]
        %v907 = vld [vmem:[%s436 + $0x28] sm:$0xf]
        %v908 = vld [vmem:[%s436 + $0x2c] sm:$0xf]
        %v909 = vld [vmem:[%s436 + $0x30] sm:$0xf]
        %v910 = vld [vmem:[%s436 + $0x34] sm:$0xf]
        %v911 = vld [vmem:[%s436 + $0x38] sm:$0xf]
        %v912 = vld [vmem:[%s436 + $0x3c] sm:$0xf]
        %v913 = vld [vmem:[%s436 + $0x40] sm:$0xf]
        %v914 = vld [vmem:[%s436 + $0x44] sm:$0xf]
        %v915 = vld [vmem:[%s436 + $0x48] sm:$0xf]
        %v916 = vld [vmem:[%s436 + $0x4c] sm:$0xf]
        %v917 = vld [vmem:[%s436 + $0x50] sm:$0xf]
        %v918 = vld [vmem:[%s436 + $0x54] sm:$0xf]
        %v919 = vld [vmem:[%s436 + $0x58] sm:$0xf]
        %v920 = vld [vmem:[%s436 + $0x5c] sm:$0xf]
        %v921 = vld [vmem:[%s436 + $0x60] sm:$0xf]
        %v922 = vld [vmem:[%s436 + $0x64] sm:$0xf]
        %v923 = vld [vmem:[%s436 + $0x68] sm:$0xf]
        %v924 = vld [vmem:[%s436 + $0x6c] sm:$0xf]
        %v925 = vld [vmem:[%s436 + $0x70] sm:$0xf]
        %v926 = vld [vmem:[%s436 + $0x74] sm:$0xf]
        %v927 = vld [vmem:[%s436 + $0x78] sm:$0xf]
        %v928 = vld [vmem:[%s436 + $0x7c] sm:$0xf]
        %v929 = vld [vmem:[%s370] sm:$0xff]
        %v930 = vld [vmem:[%s370 + $0x8] sm:$0xff]
        %v963 = vunpack.c.l.b16 %v897
        %v964 = vunpack.c.l.b16 %v898
        %v965 = vunpack.c.l.b16 %v899
        %v966 = vunpack.c.l.b16 %v900
        %v967 = vunpack.c.l.b16 %v901
        %v968 = vunpack.c.l.b16 %v902
        %v969 = vunpack.c.l.b16 %v903
        %v970 = vunpack.c.l.b16 %v904
        %v971 = vunpack.c.l.b16 %v905
        %v972 = vunpack.c.l.b16 %v906
        %v973 = vunpack.c.l.b16 %v907
        %v974 = vunpack.c.l.b16 %v908
        %v975 = vunpack.c.l.b16 %v909
        %v976 = vunpack.c.l.b16 %v910
        %v977 = vunpack.c.l.b16 %v911
        %v978 = vunpack.c.l.b16 %v912
        %v979 = vunpack.c.l.b16 %v913
        %v980 = vunpack.c.l.b16 %v914
        %v981 = vunpack.c.l.b16 %v915
        %v982 = vunpack.c.l.b16 %v916
        %v983 = vunpack.c.l.b16 %v917
        %v984 = vunpack.c.l.b16 %v918
        %v985 = vunpack.c.l.b16 %v919
        %v986 = vunpack.c.l.b16 %v920
        %v987 = vunpack.c.l.b16 %v921
        %v988 = vunpack.c.l.b16 %v922
        %v989 = vunpack.c.l.b16 %v923
        %v990 = vunpack.c.l.b16 %v924
        %v991 = vunpack.c.l.b16 %v925
        %v992 = vunpack.c.l.b16 %v926
        %v993 = vunpack.c.l.b16 %v927
        %v994 = vunpack.c.l.b16 %v928
        %v995 = vpack.c.b16 %v964, %v963
        %v996 = vpack.c.b16 %v966, %v965
        %v997 = vpack.c.b16 %v968, %v967
        %v998 = vpack.c.b16 %v970, %v969
        %v999 = vpack.c.b16 %v972, %v971
        %v1000 = vpack.c.b16 %v974, %v973
        %v1001 = vpack.c.b16 %v976, %v975
        %v1002 = vpack.c.b16 %v978, %v977
        %v1003 = vpack.c.b16 %v980, %v979
        %v1004 = vpack.c.b16 %v982, %v981
        %v1005 = vpack.c.b16 %v984, %v983
        %v1006 = vpack.c.b16 %v986, %v985
        %v1007 = vpack.c.b16 %v988, %v987
        %v1008 = vpack.c.b16 %v990, %v989
        %v1009 = vpack.c.b16 %v992, %v991
        %v1010 = vpack.c.b16 %v994, %v993
        %v1013 = vunpack.c.l.b16 %v929
        %v1014 = vunpack.c.h.b16 %v929
        %v1015 = vunpack.c.l.b16 %v930
        %v1016 = vunpack.c.h.b16 %v930
        %v1017 = vpack.c.b16 %v1015, %v1013
        %v1018 = vpack.c.b16 %v1016, %v1014
        %vm1021 = vcmask 130048
        %v1023 = vsel %vm1021, %v995, 0
        %v1026 = vsel %vm1021, %v996, 0
        %v1029 = vsel %vm1021, %v997, 0
        %v1032 = vsel %vm1021, %v998, 0
        %v1035 = vsel %vm1021, %v999, 0
        %v1038 = vsel %vm1021, %v1000, 0
        %v1041 = vsel %vm1021, %v1001, 0
        %v1044 = vsel %vm1021, %v1002, 0
        %v1047 = vsel %vm1021, %v1003, 0
        %v1050 = vsel %vm1021, %v1004, 0
        %v1053 = vsel %vm1021, %v1005, 0
        %v1056 = vsel %vm1021, %v1006, 0
        %v1059 = vsel %vm1021, %v1007, 0
        %v1062 = vsel %vm1021, %v1008, 0
        %v1065 = vsel %vm1021, %v1009, 0
        %v1068 = vsel %vm1021, %v1010, 0
        %1070 = vmatprep.subr.bf16.mxu0 0
        %1071 = vmatpush1.bf16.msra.mxu0 0
        %1072 = vmatprep.subr.bf16.mxu0 0
        %1073 = vmatpush1.bf16.msra.mxu0 0
        %1074 = vmatprep.subr.bf16.mxu0 0
        %1075 = vmatpush1.bf16.msra.mxu0 0
        %1076 = vmatprep.subr.bf16.mxu0 0
        %1077 = vmatpush1.bf16.msra.mxu0 0
        %1078 = vmatprep.subr.bf16.mxu0 0
        %1079 = vmatpush1.bf16.msra.mxu0 0
        %1080 = vmatprep.subr.bf16.mxu0 0
        %1081 = vmatpush1.bf16.msra.mxu0 0
        %1082 = vmatprep.subr.bf16.mxu0 0
        %1083 = vmatpush1.bf16.msra.mxu0 0
        %1084 = vmatprep.subr.bf16.mxu0 %v1018
        %1085 = vmatpush1.bf16.msra.mxu0 %v1017
        %1086 = vmatprep.subr.bf16.mxu0 0
        %1087 = vmatpush2.bf16.msra.mxu0 0
        %1088 = vmatprep.subr.bf16.mxu0 0
        %1089 = vmatpush2.bf16.msra.mxu0 0
        %1090 = vmatprep.subr.bf16.mxu0 0
        %1091 = vmatpush2.bf16.msra.mxu0 0
        %1092 = vmatprep.subr.bf16.mxu0 0
        %1093 = vmatpush2.bf16.msra.mxu0 0
        %1094 = vmatprep.subr.bf16.mxu0 0
        %1095 = vmatpush2.bf16.msra.mxu0 0
        %1096 = vmatprep.subr.bf16.mxu0 0
        %1097 = vmatpush2.bf16.msra.mxu0 0
        %1098 = vmatprep.subr.bf16.mxu0 0
        %1099 = vmatpush2.bf16.msra.mxu0 0
        %1100 = vmatprep.subr.bf16.mxu0 0
        %1101 = vmatpush2.bf16.msra.mxu0 0
        %1102 = vmatprep.mubr.bf16.mxu0 0
        %1103 = vmatmul.mubr.bf16.gmra.mxu0 %v1023
        %v1104 = vpop.f32.mrf.mxu0
        %v1105 = vadd.f32 0.0, %v1104
        %v1106 = vpop.f32.mrf.mxu0
        %v1107 = vadd.f32 0.0, %v1106
        %v1108 = vpop.f32.mrf.mxu0
        %v1109 = vadd.f32 0.0, %v1108
        %v1110 = vpop.f32.mrf.mxu0
        %v1111 = vadd.f32 0.0, %v1110
        %1112 = vmatprep.mubr.bf16.mxu0 0
        %1113 = vmatmul.mubr.bf16.gmra.mxu0 %v1026
        %v1114 = vpop.f32.mrf.mxu0
        %v1115 = vadd.f32 0.0, %v1114
        %v1116 = vpop.f32.mrf.mxu0
        %v1117 = vadd.f32 0.0, %v1116
        %v1118 = vpop.f32.mrf.mxu0
        %v1119 = vadd.f32 0.0, %v1118
        %v1120 = vpop.f32.mrf.mxu0
        %v1121 = vadd.f32 0.0, %v1120
        %1122 = vmatprep.mubr.bf16.mxu0 0
        %1123 = vmatmul.mubr.bf16.gmra.mxu0 %v1029
        %v1124 = vpop.f32.mrf.mxu0
        %v1125 = vadd.f32 0.0, %v1124
        %v1126 = vpop.f32.mrf.mxu0
        %v1127 = vadd.f32 0.0, %v1126
        %v1128 = vpop.f32.mrf.mxu0
        %v1129 = vadd.f32 0.0, %v1128
        %v1130 = vpop.f32.mrf.mxu0
        %v1131 = vadd.f32 0.0, %v1130
        %1132 = vmatprep.mubr.bf16.mxu0 0
        %1133 = vmatmul.mubr.bf16.gmra.mxu0 %v1032
        %v1134 = vpop.f32.mrf.mxu0
        %v1135 = vadd.f32 0.0, %v1134
        %v1136 = vpop.f32.mrf.mxu0
        %v1137 = vadd.f32 0.0, %v1136
        %v1138 = vpop.f32.mrf.mxu0
        %v1139 = vadd.f32 0.0, %v1138
        %v1140 = vpop.f32.mrf.mxu0
        %v1141 = vadd.f32 0.0, %v1140
        %1142 = vmatprep.mubr.bf16.mxu0 0
        %1143 = vmatmul.mubr.bf16.gmra.mxu0 %v1035
        %v1144 = vpop.f32.mrf.mxu0
        %v1145 = vadd.f32 0.0, %v1144
        %v1146 = vpop.f32.mrf.mxu0
        %v1147 = vadd.f32 0.0, %v1146
        %v1148 = vpop.f32.mrf.mxu0
        %v1149 = vadd.f32 0.0, %v1148
        %v1150 = vpop.f32.mrf.mxu0
        %v1151 = vadd.f32 0.0, %v1150
        %1152 = vmatprep.mubr.bf16.mxu0 0
        %1153 = vmatmul.mubr.bf16.gmra.mxu0 %v1038
        %v1154 = vpop.f32.mrf.mxu0
        %v1155 = vadd.f32 0.0, %v1154
        %v1156 = vpop.f32.mrf.mxu0
        %v1157 = vadd.f32 0.0, %v1156
        %v1158 = vpop.f32.mrf.mxu0
        %v1159 = vadd.f32 0.0, %v1158
        %v1160 = vpop.f32.mrf.mxu0
        %v1161 = vadd.f32 0.0, %v1160
        %1162 = vmatprep.mubr.bf16.mxu0 0
        %1163 = vmatmul.mubr.bf16.gmra.mxu0 %v1041
        %v1164 = vpop.f32.mrf.mxu0
        %v1165 = vadd.f32 0.0, %v1164
        %v1166 = vpop.f32.mrf.mxu0
        %v1167 = vadd.f32 0.0, %v1166
        %v1168 = vpop.f32.mrf.mxu0
        %v1169 = vadd.f32 0.0, %v1168
        %v1170 = vpop.f32.mrf.mxu0
        %v1171 = vadd.f32 0.0, %v1170
        %1172 = vmatprep.mubr.bf16.mxu0 0
        %1173 = vmatmul.mubr.bf16.gmra.mxu0 %v1044
        %v1174 = vpop.f32.mrf.mxu0
        %v1175 = vadd.f32 0.0, %v1174
        %v1176 = vpop.f32.mrf.mxu0
        %v1177 = vadd.f32 0.0, %v1176
        %v1178 = vpop.f32.mrf.mxu0
        %v1179 = vadd.f32 0.0, %v1178
        %v1180 = vpop.f32.mrf.mxu0
        %v1181 = vadd.f32 0.0, %v1180
        %1182 = vmatprep.mubr.bf16.mxu0 0
        %1183 = vmatmul.mubr.bf16.gmra.mxu0 %v1047
        %v1184 = vpop.f32.mrf.mxu0
        %v1185 = vadd.f32 0.0, %v1184
        %v1186 = vpop.f32.mrf.mxu0
        %v1187 = vadd.f32 0.0, %v1186
        %v1188 = vpop.f32.mrf.mxu0
        %v1189 = vadd.f32 0.0, %v1188
        %v1190 = vpop.f32.mrf.mxu0
        %v1191 = vadd.f32 0.0, %v1190
        %1192 = vmatprep.mubr.bf16.mxu0 0
        %1193 = vmatmul.mubr.bf16.gmra.mxu0 %v1050
        %v1194 = vpop.f32.mrf.mxu0
        %v1195 = vadd.f32 0.0, %v1194
        %v1196 = vpop.f32.mrf.mxu0
        %v1197 = vadd.f32 0.0, %v1196
        %v1198 = vpop.f32.mrf.mxu0
        %v1199 = vadd.f32 0.0, %v1198
        %v1200 = vpop.f32.mrf.mxu0
        %v1201 = vadd.f32 0.0, %v1200
        %1202 = vmatprep.mubr.bf16.mxu0 0
        %1203 = vmatmul.mubr.bf16.gmra.mxu0 %v1053
        %v1204 = vpop.f32.mrf.mxu0
        %v1205 = vadd.f32 0.0, %v1204
        %v1206 = vpop.f32.mrf.mxu0
        %v1207 = vadd.f32 0.0, %v1206
        %v1208 = vpop.f32.mrf.mxu0
        %v1209 = vadd.f32 0.0, %v1208
        %v1210 = vpop.f32.mrf.mxu0
        %v1211 = vadd.f32 0.0, %v1210
        %1212 = vmatprep.mubr.bf16.mxu0 0
        %1213 = vmatmul.mubr.bf16.gmra.mxu0 %v1056
        %v1214 = vpop.f32.mrf.mxu0
        %v1215 = vadd.f32 0.0, %v1214
        %v1216 = vpop.f32.mrf.mxu0
        %v1217 = vadd.f32 0.0, %v1216
        %v1218 = vpop.f32.mrf.mxu0
        %v1219 = vadd.f32 0.0, %v1218
        %v1220 = vpop.f32.mrf.mxu0
        %v1221 = vadd.f32 0.0, %v1220
        %1222 = vmatprep.mubr.bf16.mxu0 0
        %1223 = vmatmul.mubr.bf16.gmra.mxu0 %v1059
        %v1224 = vpop.f32.mrf.mxu0
        %v1225 = vadd.f32 0.0, %v1224
        %v1226 = vpop.f32.mrf.mxu0
        %v1227 = vadd.f32 0.0, %v1226
        %v1228 = vpop.f32.mrf.mxu0
        %v1229 = vadd.f32 0.0, %v1228
        %v1230 = vpop.f32.mrf.mxu0
        %v1231 = vadd.f32 0.0, %v1230
        %1232 = vmatprep.mubr.bf16.mxu0 0
        %1233 = vmatmul.mubr.bf16.gmra.mxu0 %v1062
        %v1234 = vpop.f32.mrf.mxu0
        %v1235 = vadd.f32 0.0, %v1234
        %v1236 = vpop.f32.mrf.mxu0
        %v1237 = vadd.f32 0.0, %v1236
        %v1238 = vpop.f32.mrf.mxu0
        %v1239 = vadd.f32 0.0, %v1238
        %v1240 = vpop.f32.mrf.mxu0
        %v1241 = vadd.f32 0.0, %v1240
        %1242 = vmatprep.mubr.bf16.mxu0 0
        %1243 = vmatmul.mubr.bf16.gmra.mxu0 %v1065
        %v1244 = vpop.f32.mrf.mxu0
        %v1245 = vadd.f32 0.0, %v1244
        %v1246 = vpop.f32.mrf.mxu0
        %v1247 = vadd.f32 0.0, %v1246
        %v1248 = vpop.f32.mrf.mxu0
        %v1249 = vadd.f32 0.0, %v1248
        %v1250 = vpop.f32.mrf.mxu0
        %v1251 = vadd.f32 0.0, %v1250
        %1252 = vmatprep.mubr.bf16.mxu0 0
        %1253 = vmatmul.mubr.bf16.gmra.mxu0 %v1068
        %v1254 = vpop.f32.mrf.mxu0
        %v1255 = vadd.f32 0.0, %v1254
        %v1256 = vpop.f32.mrf.mxu0
        %v1257 = vadd.f32 0.0, %v1256
        %v1258 = vpop.f32.mrf.mxu0
        %v1259 = vadd.f32 0.0, %v1258
        %v1260 = vpop.f32.mrf.mxu0
        %v1261 = vadd.f32 0.0, %v1260
        %1262 = vdwg.mxu0
        %v1263 = vand.u32 2147483647, %v833
        %v1264 = vand.u32 2147483647, %v834
        %v1265 = vand.u32 2147483647, %v835
        %v1266 = vand.u32 2147483647, %v836
        %v1267 = vand.u32 2147483647, %v837
        %v1268 = vand.u32 2147483647, %v838
        %v1269 = vand.u32 2147483647, %v839
        %v1270 = vand.u32 2147483647, %v840
        %v1271 = vand.u32 2147483647, %v841
        %v1272 = vand.u32 2147483647, %v842
        %v1273 = vand.u32 2147483647, %v843
        %v1274 = vand.u32 2147483647, %v844
        %v1275 = vand.u32 2147483647, %v845
        %v1276 = vand.u32 2147483647, %v846
        %v1277 = vand.u32 2147483647, %v847
        %v1278 = vand.u32 2147483647, %v848
        %v1279 = vand.u32 2147483647, %v849
        %v1280 = vand.u32 2147483647, %v850
        %v1281 = vand.u32 2147483647, %v851
        %v1282 = vand.u32 2147483647, %v852
        %v1283 = vand.u32 2147483647, %v853
        %v1284 = vand.u32 2147483647, %v854
        %v1285 = vand.u32 2147483647, %v855
        %v1286 = vand.u32 2147483647, %v856
        %v1287 = vand.u32 2147483647, %v857
        %v1288 = vand.u32 2147483647, %v858
        %v1289 = vand.u32 2147483647, %v859
        %v1290 = vand.u32 2147483647, %v860
        %v1291 = vand.u32 2147483647, %v861
        %v1292 = vand.u32 2147483647, %v862
        %v1293 = vand.u32 2147483647, %v863
        %v1294 = vand.u32 2147483647, %v864
        %v1295 = vand.u32 2147483647, %v865
        %v1296 = vand.u32 2147483647, %v866
        %v1297 = vand.u32 2147483647, %v867
        %v1298 = vand.u32 2147483647, %v868
        %v1299 = vand.u32 2147483647, %v869
        %v1300 = vand.u32 2147483647, %v870
        %v1301 = vand.u32 2147483647, %v871
        %v1302 = vand.u32 2147483647, %v872
        %v1303 = vand.u32 2147483647, %v873
        %v1304 = vand.u32 2147483647, %v874
        %v1305 = vand.u32 2147483647, %v875
        %v1306 = vand.u32 2147483647, %v876
        %v1307 = vand.u32 2147483647, %v877
        %v1308 = vand.u32 2147483647, %v878
        %v1309 = vand.u32 2147483647, %v879
        %v1310 = vand.u32 2147483647, %v880
        %v1311 = vand.u32 2147483647, %v881
        %v1312 = vand.u32 2147483647, %v882
        %v1313 = vand.u32 2147483647, %v883
        %v1314 = vand.u32 2147483647, %v884
        %v1315 = vand.u32 2147483647, %v885
        %v1316 = vand.u32 2147483647, %v886
        %v1317 = vand.u32 2147483647, %v887
        %v1318 = vand.u32 2147483647, %v888
        %v1319 = vand.u32 2147483647, %v889
        %v1320 = vand.u32 2147483647, %v890
        %v1321 = vand.u32 2147483647, %v891
        %v1322 = vand.u32 2147483647, %v892
        %v1323 = vand.u32 2147483647, %v893
        %v1324 = vand.u32 2147483647, %v894
        %v1325 = vand.u32 2147483647, %v895
        %v1326 = vand.u32 2147483647, %v896
        %v1327 = vsub.f32 0.0, %v1263
        %v1328 = vsub.f32 0.0, %v1264
        %v1329 = vsub.f32 0.0, %v1265
        %v1330 = vsub.f32 0.0, %v1266
        %v1331 = vsub.f32 0.0, %v1267
        %v1332 = vsub.f32 0.0, %v1268
        %v1333 = vsub.f32 0.0, %v1269
        %v1334 = vsub.f32 0.0, %v1270
        %v1335 = vsub.f32 0.0, %v1271
        %v1336 = vsub.f32 0.0, %v1272
        %v1337 = vsub.f32 0.0, %v1273
        %v1338 = vsub.f32 0.0, %v1274
        %v1339 = vsub.f32 0.0, %v1275
        %v1340 = vsub.f32 0.0, %v1276
        %v1341 = vsub.f32 0.0, %v1277
        %v1342 = vsub.f32 0.0, %v1278
        %v1343 = vsub.f32 0.0, %v1279
        %v1344 = vsub.f32 0.0, %v1280
        %v1345 = vsub.f32 0.0, %v1281
        %v1346 = vsub.f32 0.0, %v1282
        %v1347 = vsub.f32 0.0, %v1283
        %v1348 = vsub.f32 0.0, %v1284
        %v1349 = vsub.f32 0.0, %v1285
        %v1350 = vsub.f32 0.0, %v1286
        %v1351 = vsub.f32 0.0, %v1287
        %v1352 = vsub.f32 0.0, %v1288
        %v1353 = vsub.f32 0.0, %v1289
        %v1354 = vsub.f32 0.0, %v1290
        %v1355 = vsub.f32 0.0, %v1291
        %v1356 = vsub.f32 0.0, %v1292
        %v1357 = vsub.f32 0.0, %v1293
        %v1358 = vsub.f32 0.0, %v1294
        %v1359 = vsub.f32 0.0, %v1295
        %v1360 = vsub.f32 0.0, %v1296
        %v1361 = vsub.f32 0.0, %v1297
        %v1362 = vsub.f32 0.0, %v1298
        %v1363 = vsub.f32 0.0, %v1299
        %v1364 = vsub.f32 0.0, %v1300
        %v1365 = vsub.f32 0.0, %v1301
        %v1366 = vsub.f32 0.0, %v1302
        %v1367 = vsub.f32 0.0, %v1303
        %v1368 = vsub.f32 0.0, %v1304
        %v1369 = vsub.f32 0.0, %v1305
        %v1370 = vsub.f32 0.0, %v1306
        %v1371 = vsub.f32 0.0, %v1307
        %v1372 = vsub.f32 0.0, %v1308
        %v1373 = vsub.f32 0.0, %v1309
        %v1374 = vsub.f32 0.0, %v1310
        %v1375 = vsub.f32 0.0, %v1311
        %v1376 = vsub.f32 0.0, %v1312
        %v1377 = vsub.f32 0.0, %v1313
        %v1378 = vsub.f32 0.0, %v1314
        %v1379 = vsub.f32 0.0, %v1315
        %v1380 = vsub.f32 0.0, %v1316
        %v1381 = vsub.f32 0.0, %v1317
        %v1382 = vsub.f32 0.0, %v1318
        %v1383 = vsub.f32 0.0, %v1319
        %v1384 = vsub.f32 0.0, %v1320
        %v1385 = vsub.f32 0.0, %v1321
        %v1386 = vsub.f32 0.0, %v1322
        %v1387 = vsub.f32 0.0, %v1323
        %v1388 = vsub.f32 0.0, %v1324
        %v1389 = vsub.f32 0.0, %v1325
        %v1390 = vsub.f32 0.0, %v1326
        %v1391 = vmul.f32 %v1327, 1.442695
        %v1392 = vpow.pop %v1391
        %v1393 = vmul.f32 %v1328, 1.442695
        %v1394 = vpow.pop %v1393
        %v1395 = vmul.f32 %v1329, 1.442695
        %v1396 = vpow.pop %v1395
        %v1397 = vmul.f32 %v1330, 1.442695
        %v1398 = vpow.pop %v1397
        %v1399 = vmul.f32 %v1331, 1.442695
        %v1400 = vpow.pop %v1399
        %v1401 = vmul.f32 %v1332, 1.442695
        %v1402 = vpow.pop %v1401
        %v1403 = vmul.f32 %v1333, 1.442695
        %v1404 = vpow.pop %v1403
        %v1405 = vmul.f32 %v1334, 1.442695
        %v1406 = vpow.pop %v1405
        %v1407 = vmul.f32 %v1335, 1.442695
        %v1408 = vpow.pop %v1407
        %v1409 = vmul.f32 %v1336, 1.442695
        %v1410 = vpow.pop %v1409
        %v1411 = vmul.f32 %v1337, 1.442695
        %v1412 = vpow.pop %v1411
        %v1413 = vmul.f32 %v1338, 1.442695
        %v1414 = vpow.pop %v1413
        %v1415 = vmul.f32 %v1339, 1.442695
        %v1416 = vpow.pop %v1415
        %v1417 = vmul.f32 %v1340, 1.442695
        %v1418 = vpow.pop %v1417
        %v1419 = vmul.f32 %v1341, 1.442695
        %v1420 = vpow.pop %v1419
        %v1421 = vmul.f32 %v1342, 1.442695
        %v1422 = vpow.pop %v1421
        %v1423 = vmul.f32 %v1343, 1.442695
        %v1424 = vpow.pop %v1423
        %v1425 = vmul.f32 %v1344, 1.442695
        %v1426 = vpow.pop %v1425
        %v1427 = vmul.f32 %v1345, 1.442695
        %v1428 = vpow.pop %v1427
        %v1429 = vmul.f32 %v1346, 1.442695
        %v1430 = vpow.pop %v1429
        %v1431 = vmul.f32 %v1347, 1.442695
        %v1432 = vpow.pop %v1431
        %v1433 = vmul.f32 %v1348, 1.442695
        %v1434 = vpow.pop %v1433
        %v1435 = vmul.f32 %v1349, 1.442695
        %v1436 = vpow.pop %v1435
        %v1437 = vmul.f32 %v1350, 1.442695
        %v1438 = vpow.pop %v1437
        %v1439 = vmul.f32 %v1351, 1.442695
        %v1440 = vpow.pop %v1439
        %v1441 = vmul.f32 %v1352, 1.442695
        %v1442 = vpow.pop %v1441
        %v1443 = vmul.f32 %v1353, 1.442695
        %v1444 = vpow.pop %v1443
        %v1445 = vmul.f32 %v1354, 1.442695
        %v1446 = vpow.pop %v1445
        %v1447 = vmul.f32 %v1355, 1.442695
        %v1448 = vpow.pop %v1447
        %v1449 = vmul.f32 %v1356, 1.442695
        %v1450 = vpow.pop %v1449
        %v1451 = vmul.f32 %v1357, 1.442695
        %v1452 = vpow.pop %v1451
        %v1453 = vmul.f32 %v1358, 1.442695
        %v1454 = vpow.pop %v1453
        %v1455 = vmul.f32 %v1359, 1.442695
        %v1456 = vpow.pop %v1455
        %v1457 = vmul.f32 %v1360, 1.442695
        %v1458 = vpow.pop %v1457
        %v1459 = vmul.f32 %v1361, 1.442695
        %v1460 = vpow.pop %v1459
        %v1461 = vmul.f32 %v1362, 1.442695
        %v1462 = vpow.pop %v1461
        %v1463 = vmul.f32 %v1363, 1.442695
        %v1464 = vpow.pop %v1463
        %v1465 = vmul.f32 %v1364, 1.442695
        %v1466 = vpow.pop %v1465
        %v1467 = vmul.f32 %v1365, 1.442695
        %v1468 = vpow.pop %v1467
        %v1469 = vmul.f32 %v1366, 1.442695
        %v1470 = vpow.pop %v1469
        %v1471 = vmul.f32 %v1367, 1.442695
        %v1472 = vpow.pop %v1471
        %v1473 = vmul.f32 %v1368, 1.442695
        %v1474 = vpow.pop %v1473
        %v1475 = vmul.f32 %v1369, 1.442695
        %v1476 = vpow.pop %v1475
        %v1477 = vmul.f32 %v1370, 1.442695
        %v1478 = vpow.pop %v1477
        %v1479 = vmul.f32 %v1371, 1.442695
        %v1480 = vpow.pop %v1479
        %v1481 = vmul.f32 %v1372, 1.442695
        %v1482 = vpow.pop %v1481
        %v1483 = vmul.f32 %v1373, 1.442695
        %v1484 = vpow.pop %v1483
        %v1485 = vmul.f32 %v1374, 1.442695
        %v1486 = vpow.pop %v1485
        %v1487 = vmul.f32 %v1375, 1.442695
        %v1488 = vpow.pop %v1487
        %v1489 = vmul.f32 %v1376, 1.442695
        %v1490 = vpow.pop %v1489
        %v1491 = vmul.f32 %v1377, 1.442695
        %v1492 = vpow.pop %v1491
        %v1493 = vmul.f32 %v1378, 1.442695
        %v1494 = vpow.pop %v1493
        %v1495 = vmul.f32 %v1379, 1.442695
        %v1496 = vpow.pop %v1495
        %v1497 = vmul.f32 %v1380, 1.442695
        %v1498 = vpow.pop %v1497
        %v1499 = vmul.f32 %v1381, 1.442695
        %v1500 = vpow.pop %v1499
        %v1501 = vmul.f32 %v1382, 1.442695
        %v1502 = vpow.pop %v1501
        %v1503 = vmul.f32 %v1383, 1.442695
        %v1504 = vpow.pop %v1503
        %v1505 = vmul.f32 %v1384, 1.442695
        %v1506 = vpow.pop %v1505
        %v1507 = vmul.f32 %v1385, 1.442695
        %v1508 = vpow.pop %v1507
        %v1509 = vmul.f32 %v1386, 1.442695
        %v1510 = vpow.pop %v1509
        %v1511 = vmul.f32 %v1387, 1.442695
        %v1512 = vpow.pop %v1511
        %v1513 = vmul.f32 %v1388, 1.442695
        %v1514 = vpow.pop %v1513
        %v1515 = vmul.f32 %v1389, 1.442695
        %v1516 = vpow.pop %v1515
        %v1517 = vmul.f32 %v1390, 1.442695
        %v1518 = vpow.pop %v1517
        %v1519 = vadd.f32 %v1392, 1.0
        %v1520 = vlog2.pop %v1519
        %v1521 = vmul.f32 %v1520, 0.6931472
        %v1522 = vmul.f32 -0.5, %v1392
        %v1523 = vadd.f32 %v1522, 1.0
        %v1524 = vmul.f32 %v1523, %v1392
        %v1525 = vand.u32 2147483647, %v1392
        %vm1526 = vcmp.lt.f32.partialorder %v1525, 0.0004427343
        %v1527 = vsel %vm1526, %v1524, %v1521
        %v1528 = vadd.f32 %v1394, 1.0
        %v1529 = vlog2.pop %v1528
        %v1530 = vmul.f32 %v1529, 0.6931472
        %v1531 = vmul.f32 -0.5, %v1394
        %v1532 = vadd.f32 %v1531, 1.0
        %v1533 = vmul.f32 %v1532, %v1394
        %v1534 = vand.u32 2147483647, %v1394
        %vm1535 = vcmp.lt.f32.partialorder %v1534, 0.0004427343
        %v1536 = vsel %vm1535, %v1533, %v1530
        %v1537 = vadd.f32 %v1396, 1.0
        %v1538 = vlog2.pop %v1537
        %v1539 = vmul.f32 %v1538, 0.6931472
        %v1540 = vmul.f32 -0.5, %v1396
        %v1541 = vadd.f32 %v1540, 1.0
        %v1542 = vmul.f32 %v1541, %v1396
        %v1543 = vand.u32 2147483647, %v1396
        %vm1544 = vcmp.lt.f32.partialorder %v1543, 0.0004427343
        %v1545 = vsel %vm1544, %v1542, %v1539
        %v1546 = vadd.f32 %v1398, 1.0
        %v1547 = vlog2.pop %v1546
        %v1548 = vmul.f32 %v1547, 0.6931472
        %v1549 = vmul.f32 -0.5, %v1398
        %v1550 = vadd.f32 %v1549, 1.0
        %v1551 = vmul.f32 %v1550, %v1398
        %v1552 = vand.u32 2147483647, %v1398
        %vm1553 = vcmp.lt.f32.partialorder %v1552, 0.0004427343
        %v1554 = vsel %vm1553, %v1551, %v1548
        %v1555 = vadd.f32 %v1400, 1.0
        %v1556 = vlog2.pop %v1555
        %v1557 = vmul.f32 %v1556, 0.6931472
        %v1558 = vmul.f32 -0.5, %v1400
        %v1559 = vadd.f32 %v1558, 1.0
        %v1560 = vmul.f32 %v1559, %v1400
        %v1561 = vand.u32 2147483647, %v1400
        %vm1562 = vcmp.lt.f32.partialorder %v1561, 0.0004427343
        %v1563 = vsel %vm1562, %v1560, %v1557
        %v1564 = vadd.f32 %v1402, 1.0
        %v1565 = vlog2.pop %v1564
        %v1566 = vmul.f32 %v1565, 0.6931472
        %v1567 = vmul.f32 -0.5, %v1402
        %v1568 = vadd.f32 %v1567, 1.0
        %v1569 = vmul.f32 %v1568, %v1402
        %v1570 = vand.u32 2147483647, %v1402
        %vm1571 = vcmp.lt.f32.partialorder %v1570, 0.0004427343
        %v1572 = vsel %vm1571, %v1569, %v1566
        %v1573 = vadd.f32 %v1404, 1.0
        %v1574 = vlog2.pop %v1573
        %v1575 = vmul.f32 %v1574, 0.6931472
        %v1576 = vmul.f32 -0.5, %v1404
        %v1577 = vadd.f32 %v1576, 1.0
        %v1578 = vmul.f32 %v1577, %v1404
        %v1579 = vand.u32 2147483647, %v1404
        %vm1580 = vcmp.lt.f32.partialorder %v1579, 0.0004427343
        %v1581 = vsel %vm1580, %v1578, %v1575
        %v1582 = vadd.f32 %v1406, 1.0
        %v1583 = vlog2.pop %v1582
        %v1584 = vmul.f32 %v1583, 0.6931472
        %v1585 = vmul.f32 -0.5, %v1406
        %v1586 = vadd.f32 %v1585, 1.0
        %v1587 = vmul.f32 %v1586, %v1406
        %v1588 = vand.u32 2147483647, %v1406
        %vm1589 = vcmp.lt.f32.partialorder %v1588, 0.0004427343
        %v1590 = vsel %vm1589, %v1587, %v1584
        %v1591 = vadd.f32 %v1408, 1.0
        %v1592 = vlog2.pop %v1591
        %v1593 = vmul.f32 %v1592, 0.6931472
        %v1594 = vmul.f32 -0.5, %v1408
        %v1595 = vadd.f32 %v1594, 1.0
        %v1596 = vmul.f32 %v1595, %v1408
        %v1597 = vand.u32 2147483647, %v1408
        %vm1598 = vcmp.lt.f32.partialorder %v1597, 0.0004427343
        %v1599 = vsel %vm1598, %v1596, %v1593
        %v1600 = vadd.f32 %v1410, 1.0
        %v1601 = vlog2.pop %v1600
        %v1602 = vmul.f32 %v1601, 0.6931472
        %v1603 = vmul.f32 -0.5, %v1410
        %v1604 = vadd.f32 %v1603, 1.0
        %v1605 = vmul.f32 %v1604, %v1410
        %v1606 = vand.u32 2147483647, %v1410
        %vm1607 = vcmp.lt.f32.partialorder %v1606, 0.0004427343
        %v1608 = vsel %vm1607, %v1605, %v1602
        %v1609 = vadd.f32 %v1412, 1.0
        %v1610 = vlog2.pop %v1609
        %v1611 = vmul.f32 %v1610, 0.6931472
        %v1612 = vmul.f32 -0.5, %v1412
        %v1613 = vadd.f32 %v1612, 1.0
        %v1614 = vmul.f32 %v1613, %v1412
        %v1615 = vand.u32 2147483647, %v1412
        %vm1616 = vcmp.lt.f32.partialorder %v1615, 0.0004427343
        %v1617 = vsel %vm1616, %v1614, %v1611
        %v1618 = vadd.f32 %v1414, 1.0
        %v1619 = vlog2.pop %v1618
        %v1620 = vmul.f32 %v1619, 0.6931472
        %v1621 = vmul.f32 -0.5, %v1414
        %v1622 = vadd.f32 %v1621, 1.0
        %v1623 = vmul.f32 %v1622, %v1414
        %v1624 = vand.u32 2147483647, %v1414
        %vm1625 = vcmp.lt.f32.partialorder %v1624, 0.0004427343
        %v1626 = vsel %vm1625, %v1623, %v1620
        %v1627 = vadd.f32 %v1416, 1.0
        %v1628 = vlog2.pop %v1627
        %v1629 = vmul.f32 %v1628, 0.6931472
        %v1630 = vmul.f32 -0.5, %v1416
        %v1631 = vadd.f32 %v1630, 1.0
        %v1632 = vmul.f32 %v1631, %v1416
        %v1633 = vand.u32 2147483647, %v1416
        %vm1634 = vcmp.lt.f32.partialorder %v1633, 0.0004427343
        %v1635 = vsel %vm1634, %v1632, %v1629
        %v1636 = vadd.f32 %v1418, 1.0
        %v1637 = vlog2.pop %v1636
        %v1638 = vmul.f32 %v1637, 0.6931472
        %v1639 = vmul.f32 -0.5, %v1418
        %v1640 = vadd.f32 %v1639, 1.0
        %v1641 = vmul.f32 %v1640, %v1418
        %v1642 = vand.u32 2147483647, %v1418
        %vm1643 = vcmp.lt.f32.partialorder %v1642, 0.0004427343
        %v1644 = vsel %vm1643, %v1641, %v1638
        %v1645 = vadd.f32 %v1420, 1.0
        %v1646 = vlog2.pop %v1645
        %v1647 = vmul.f32 %v1646, 0.6931472
        %v1648 = vmul.f32 -0.5, %v1420
        %v1649 = vadd.f32 %v1648, 1.0
        %v1650 = vmul.f32 %v1649, %v1420
        %v1651 = vand.u32 2147483647, %v1420
        %vm1652 = vcmp.lt.f32.partialorder %v1651, 0.0004427343
        %v1653 = vsel %vm1652, %v1650, %v1647
        %v1654 = vadd.f32 %v1422, 1.0
        %v1655 = vlog2.pop %v1654
        %v1656 = vmul.f32 %v1655, 0.6931472
        %v1657 = vmul.f32 -0.5, %v1422
        %v1658 = vadd.f32 %v1657, 1.0
        %v1659 = vmul.f32 %v1658, %v1422
        %v1660 = vand.u32 2147483647, %v1422
        %vm1661 = vcmp.lt.f32.partialorder %v1660, 0.0004427343
        %v1662 = vsel %vm1661, %v1659, %v1656
        %v1663 = vadd.f32 %v1424, 1.0
        %v1664 = vlog2.pop %v1663
        %v1665 = vmul.f32 %v1664, 0.6931472
        %v1666 = vmul.f32 -0.5, %v1424
        %v1667 = vadd.f32 %v1666, 1.0
        %v1668 = vmul.f32 %v1667, %v1424
        %v1669 = vand.u32 2147483647, %v1424
        %vm1670 = vcmp.lt.f32.partialorder %v1669, 0.0004427343
        %v1671 = vsel %vm1670, %v1668, %v1665
        %v1672 = vadd.f32 %v1426, 1.0
        %v1673 = vlog2.pop %v1672
        %v1674 = vmul.f32 %v1673, 0.6931472
        %v1675 = vmul.f32 -0.5, %v1426
        %v1676 = vadd.f32 %v1675, 1.0
        %v1677 = vmul.f32 %v1676, %v1426
        %v1678 = vand.u32 2147483647, %v1426
        %vm1679 = vcmp.lt.f32.partialorder %v1678, 0.0004427343
        %v1680 = vsel %vm1679, %v1677, %v1674
        %v1681 = vadd.f32 %v1428, 1.0
        %v1682 = vlog2.pop %v1681
        %v1683 = vmul.f32 %v1682, 0.6931472
        %v1684 = vmul.f32 -0.5, %v1428
        %v1685 = vadd.f32 %v1684, 1.0
        %v1686 = vmul.f32 %v1685, %v1428
        %v1687 = vand.u32 2147483647, %v1428
        %vm1688 = vcmp.lt.f32.partialorder %v1687, 0.0004427343
        %v1689 = vsel %vm1688, %v1686, %v1683
        %v1690 = vadd.f32 %v1430, 1.0
        %v1691 = vlog2.pop %v1690
        %v1692 = vmul.f32 %v1691, 0.6931472
        %v1693 = vmul.f32 -0.5, %v1430
        %v1694 = vadd.f32 %v1693, 1.0
        %v1695 = vmul.f32 %v1694, %v1430
        %v1696 = vand.u32 2147483647, %v1430
        %vm1697 = vcmp.lt.f32.partialorder %v1696, 0.0004427343
        %v1698 = vsel %vm1697, %v1695, %v1692
        %v1699 = vadd.f32 %v1432, 1.0
        %v1700 = vlog2.pop %v1699
        %v1701 = vmul.f32 %v1700, 0.6931472
        %v1702 = vmul.f32 -0.5, %v1432
        %v1703 = vadd.f32 %v1702, 1.0
        %v1704 = vmul.f32 %v1703, %v1432
        %v1705 = vand.u32 2147483647, %v1432
        %vm1706 = vcmp.lt.f32.partialorder %v1705, 0.0004427343
        %v1707 = vsel %vm1706, %v1704, %v1701
        %v1708 = vadd.f32 %v1434, 1.0
        %v1709 = vlog2.pop %v1708
        %v1710 = vmul.f32 %v1709, 0.6931472
        %v1711 = vmul.f32 -0.5, %v1434
        %v1712 = vadd.f32 %v1711, 1.0
        %v1713 = vmul.f32 %v1712, %v1434
        %v1714 = vand.u32 2147483647, %v1434
        %vm1715 = vcmp.lt.f32.partialorder %v1714, 0.0004427343
        %v1716 = vsel %vm1715, %v1713, %v1710
        %v1717 = vadd.f32 %v1436, 1.0
        %v1718 = vlog2.pop %v1717
        %v1719 = vmul.f32 %v1718, 0.6931472
        %v1720 = vmul.f32 -0.5, %v1436
        %v1721 = vadd.f32 %v1720, 1.0
        %v1722 = vmul.f32 %v1721, %v1436
        %v1723 = vand.u32 2147483647, %v1436
        %vm1724 = vcmp.lt.f32.partialorder %v1723, 0.0004427343
        %v1725 = vsel %vm1724, %v1722, %v1719
        %v1726 = vadd.f32 %v1438, 1.0
        %v1727 = vlog2.pop %v1726
        %v1728 = vmul.f32 %v1727, 0.6931472
        %v1729 = vmul.f32 -0.5, %v1438
        %v1730 = vadd.f32 %v1729, 1.0
        %v1731 = vmul.f32 %v1730, %v1438
        %v1732 = vand.u32 2147483647, %v1438
        %vm1733 = vcmp.lt.f32.partialorder %v1732, 0.0004427343
        %v1734 = vsel %vm1733, %v1731, %v1728
        %v1735 = vadd.f32 %v1440, 1.0
        %v1736 = vlog2.pop %v1735
        %v1737 = vmul.f32 %v1736, 0.6931472
        %v1738 = vmul.f32 -0.5, %v1440
        %v1739 = vadd.f32 %v1738, 1.0
        %v1740 = vmul.f32 %v1739, %v1440
        %v1741 = vand.u32 2147483647, %v1440
        %vm1742 = vcmp.lt.f32.partialorder %v1741, 0.0004427343
        %v1743 = vsel %vm1742, %v1740, %v1737
        %v1744 = vadd.f32 %v1442, 1.0
        %v1745 = vlog2.pop %v1744
        %v1746 = vmul.f32 %v1745, 0.6931472
        %v1747 = vmul.f32 -0.5, %v1442
        %v1748 = vadd.f32 %v1747, 1.0
        %v1749 = vmul.f32 %v1748, %v1442
        %v1750 = vand.u32 2147483647, %v1442
        %vm1751 = vcmp.lt.f32.partialorder %v1750, 0.0004427343
        %v1752 = vsel %vm1751, %v1749, %v1746
        %v1753 = vadd.f32 %v1444, 1.0
        %v1754 = vlog2.pop %v1753
        %v1755 = vmul.f32 %v1754, 0.6931472
        %v1756 = vmul.f32 -0.5, %v1444
        %v1757 = vadd.f32 %v1756, 1.0
        %v1758 = vmul.f32 %v1757, %v1444
        %v1759 = vand.u32 2147483647, %v1444
        %vm1760 = vcmp.lt.f32.partialorder %v1759, 0.0004427343
        %v1761 = vsel %vm1760, %v1758, %v1755
        %v1762 = vadd.f32 %v1446, 1.0
        %v1763 = vlog2.pop %v1762
        %v1764 = vmul.f32 %v1763, 0.6931472
        %v1765 = vmul.f32 -0.5, %v1446
        %v1766 = vadd.f32 %v1765, 1.0
        %v1767 = vmul.f32 %v1766, %v1446
        %v1768 = vand.u32 2147483647, %v1446
        %vm1769 = vcmp.lt.f32.partialorder %v1768, 0.0004427343
        %v1770 = vsel %vm1769, %v1767, %v1764
        %v1771 = vadd.f32 %v1448, 1.0
        %v1772 = vlog2.pop %v1771
        %v1773 = vmul.f32 %v1772, 0.6931472
        %v1774 = vmul.f32 -0.5, %v1448
        %v1775 = vadd.f32 %v1774, 1.0
        %v1776 = vmul.f32 %v1775, %v1448
        %v1777 = vand.u32 2147483647, %v1448
        %vm1778 = vcmp.lt.f32.partialorder %v1777, 0.0004427343
        %v1779 = vsel %vm1778, %v1776, %v1773
        %v1780 = vadd.f32 %v1450, 1.0
        %v1781 = vlog2.pop %v1780
        %v1782 = vmul.f32 %v1781, 0.6931472
        %v1783 = vmul.f32 -0.5, %v1450
        %v1784 = vadd.f32 %v1783, 1.0
        %v1785 = vmul.f32 %v1784, %v1450
        %v1786 = vand.u32 2147483647, %v1450
        %vm1787 = vcmp.lt.f32.partialorder %v1786, 0.0004427343
        %v1788 = vsel %vm1787, %v1785, %v1782
        %v1789 = vadd.f32 %v1452, 1.0
        %v1790 = vlog2.pop %v1789
        %v1791 = vmul.f32 %v1790, 0.6931472
        %v1792 = vmul.f32 -0.5, %v1452
        %v1793 = vadd.f32 %v1792, 1.0
        %v1794 = vmul.f32 %v1793, %v1452
        %v1795 = vand.u32 2147483647, %v1452
        %vm1796 = vcmp.lt.f32.partialorder %v1795, 0.0004427343
        %v1797 = vsel %vm1796, %v1794, %v1791
        %v1798 = vadd.f32 %v1454, 1.0
        %v1799 = vlog2.pop %v1798
        %v1800 = vmul.f32 %v1799, 0.6931472
        %v1801 = vmul.f32 -0.5, %v1454
        %v1802 = vadd.f32 %v1801, 1.0
        %v1803 = vmul.f32 %v1802, %v1454
        %v1804 = vand.u32 2147483647, %v1454
        %vm1805 = vcmp.lt.f32.partialorder %v1804, 0.0004427343
        %v1806 = vsel %vm1805, %v1803, %v1800
        %v1807 = vadd.f32 %v1456, 1.0
        %v1808 = vlog2.pop %v1807
        %v1809 = vmul.f32 %v1808, 0.6931472
        %v1810 = vmul.f32 -0.5, %v1456
        %v1811 = vadd.f32 %v1810, 1.0
        %v1812 = vmul.f32 %v1811, %v1456
        %v1813 = vand.u32 2147483647, %v1456
        %vm1814 = vcmp.lt.f32.partialorder %v1813, 0.0004427343
        %v1815 = vsel %vm1814, %v1812, %v1809
        %v1816 = vadd.f32 %v1458, 1.0
        %v1817 = vlog2.pop %v1816
        %v1818 = vmul.f32 %v1817, 0.6931472
        %v1819 = vmul.f32 -0.5, %v1458
        %v1820 = vadd.f32 %v1819, 1.0
        %v1821 = vmul.f32 %v1820, %v1458
        %v1822 = vand.u32 2147483647, %v1458
        %vm1823 = vcmp.lt.f32.partialorder %v1822, 0.0004427343
        %v1824 = vsel %vm1823, %v1821, %v1818
        %v1825 = vadd.f32 %v1460, 1.0
        %v1826 = vlog2.pop %v1825
        %v1827 = vmul.f32 %v1826, 0.6931472
        %v1828 = vmul.f32 -0.5, %v1460
        %v1829 = vadd.f32 %v1828, 1.0
        %v1830 = vmul.f32 %v1829, %v1460
        %v1831 = vand.u32 2147483647, %v1460
        %vm1832 = vcmp.lt.f32.partialorder %v1831, 0.0004427343
        %v1833 = vsel %vm1832, %v1830, %v1827
        %v1834 = vadd.f32 %v1462, 1.0
        %v1835 = vlog2.pop %v1834
        %v1836 = vmul.f32 %v1835, 0.6931472
        %v1837 = vmul.f32 -0.5, %v1462
        %v1838 = vadd.f32 %v1837, 1.0
        %v1839 = vmul.f32 %v1838, %v1462
        %v1840 = vand.u32 2147483647, %v1462
        %vm1841 = vcmp.lt.f32.partialorder %v1840, 0.0004427343
        %v1842 = vsel %vm1841, %v1839, %v1836
        %v1843 = vadd.f32 %v1464, 1.0
        %v1844 = vlog2.pop %v1843
        %v1845 = vmul.f32 %v1844, 0.6931472
        %v1846 = vmul.f32 -0.5, %v1464
        %v1847 = vadd.f32 %v1846, 1.0
        %v1848 = vmul.f32 %v1847, %v1464
        %v1849 = vand.u32 2147483647, %v1464
        %vm1850 = vcmp.lt.f32.partialorder %v1849, 0.0004427343
        %v1851 = vsel %vm1850, %v1848, %v1845
        %v1852 = vadd.f32 %v1466, 1.0
        %v1853 = vlog2.pop %v1852
        %v1854 = vmul.f32 %v1853, 0.6931472
        %v1855 = vmul.f32 -0.5, %v1466
        %v1856 = vadd.f32 %v1855, 1.0
        %v1857 = vmul.f32 %v1856, %v1466
        %v1858 = vand.u32 2147483647, %v1466
        %vm1859 = vcmp.lt.f32.partialorder %v1858, 0.0004427343
        %v1860 = vsel %vm1859, %v1857, %v1854
        %v1861 = vadd.f32 %v1468, 1.0
        %v1862 = vlog2.pop %v1861
        %v1863 = vmul.f32 %v1862, 0.6931472
        %v1864 = vmul.f32 -0.5, %v1468
        %v1865 = vadd.f32 %v1864, 1.0
        %v1866 = vmul.f32 %v1865, %v1468
        %v1867 = vand.u32 2147483647, %v1468
        %vm1868 = vcmp.lt.f32.partialorder %v1867, 0.0004427343
        %v1869 = vsel %vm1868, %v1866, %v1863
        %v1870 = vadd.f32 %v1470, 1.0
        %v1871 = vlog2.pop %v1870
        %v1872 = vmul.f32 %v1871, 0.6931472
        %v1873 = vmul.f32 -0.5, %v1470
        %v1874 = vadd.f32 %v1873, 1.0
        %v1875 = vmul.f32 %v1874, %v1470
        %v1876 = vand.u32 2147483647, %v1470
        %vm1877 = vcmp.lt.f32.partialorder %v1876, 0.0004427343
        %v1878 = vsel %vm1877, %v1875, %v1872
        %v1879 = vadd.f32 %v1472, 1.0
        %v1880 = vlog2.pop %v1879
        %v1881 = vmul.f32 %v1880, 0.6931472
        %v1882 = vmul.f32 -0.5, %v1472
        %v1883 = vadd.f32 %v1882, 1.0
        %v1884 = vmul.f32 %v1883, %v1472
        %v1885 = vand.u32 2147483647, %v1472
        %vm1886 = vcmp.lt.f32.partialorder %v1885, 0.0004427343
        %v1887 = vsel %vm1886, %v1884, %v1881
        %v1888 = vadd.f32 %v1474, 1.0
        %v1889 = vlog2.pop %v1888
        %v1890 = vmul.f32 %v1889, 0.6931472
        %v1891 = vmul.f32 -0.5, %v1474
        %v1892 = vadd.f32 %v1891, 1.0
        %v1893 = vmul.f32 %v1892, %v1474
        %v1894 = vand.u32 2147483647, %v1474
        %vm1895 = vcmp.lt.f32.partialorder %v1894, 0.0004427343
        %v1896 = vsel %vm1895, %v1893, %v1890
        %v1897 = vadd.f32 %v1476, 1.0
        %v1898 = vlog2.pop %v1897
        %v1899 = vmul.f32 %v1898, 0.6931472
        %v1900 = vmul.f32 -0.5, %v1476
        %v1901 = vadd.f32 %v1900, 1.0
        %v1902 = vmul.f32 %v1901, %v1476
        %v1903 = vand.u32 2147483647, %v1476
        %vm1904 = vcmp.lt.f32.partialorder %v1903, 0.0004427343
        %v1905 = vsel %vm1904, %v1902, %v1899
        %v1906 = vadd.f32 %v1478, 1.0
        %v1907 = vlog2.pop %v1906
        %v1908 = vmul.f32 %v1907, 0.6931472
        %v1909 = vmul.f32 -0.5, %v1478
        %v1910 = vadd.f32 %v1909, 1.0
        %v1911 = vmul.f32 %v1910, %v1478
        %v1912 = vand.u32 2147483647, %v1478
        %vm1913 = vcmp.lt.f32.partialorder %v1912, 0.0004427343
        %v1914 = vsel %vm1913, %v1911, %v1908
        %v1915 = vadd.f32 %v1480, 1.0
        %v1916 = vlog2.pop %v1915
        %v1917 = vmul.f32 %v1916, 0.6931472
        %v1918 = vmul.f32 -0.5, %v1480
        %v1919 = vadd.f32 %v1918, 1.0
        %v1920 = vmul.f32 %v1919, %v1480
        %v1921 = vand.u32 2147483647, %v1480
        %vm1922 = vcmp.lt.f32.partialorder %v1921, 0.0004427343
        %v1923 = vsel %vm1922, %v1920, %v1917
        %v1924 = vadd.f32 %v1482, 1.0
        %v1925 = vlog2.pop %v1924
        %v1926 = vmul.f32 %v1925, 0.6931472
        %v1927 = vmul.f32 -0.5, %v1482
        %v1928 = vadd.f32 %v1927, 1.0
        %v1929 = vmul.f32 %v1928, %v1482
        %v1930 = vand.u32 2147483647, %v1482
        %vm1931 = vcmp.lt.f32.partialorder %v1930, 0.0004427343
        %v1932 = vsel %vm1931, %v1929, %v1926
        %v1933 = vadd.f32 %v1484, 1.0
        %v1934 = vlog2.pop %v1933
        %v1935 = vmul.f32 %v1934, 0.6931472
        %v1936 = vmul.f32 -0.5, %v1484
        %v1937 = vadd.f32 %v1936, 1.0
        %v1938 = vmul.f32 %v1937, %v1484
        %v1939 = vand.u32 2147483647, %v1484
        %vm1940 = vcmp.lt.f32.partialorder %v1939, 0.0004427343
        %v1941 = vsel %vm1940, %v1938, %v1935
        %v1942 = vadd.f32 %v1486, 1.0
        %v1943 = vlog2.pop %v1942
        %v1944 = vmul.f32 %v1943, 0.6931472
        %v1945 = vmul.f32 -0.5, %v1486
        %v1946 = vadd.f32 %v1945, 1.0
        %v1947 = vmul.f32 %v1946, %v1486
        %v1948 = vand.u32 2147483647, %v1486
        %vm1949 = vcmp.lt.f32.partialorder %v1948, 0.0004427343
        %v1950 = vsel %vm1949, %v1947, %v1944
        %v1951 = vadd.f32 %v1488, 1.0
        %v1952 = vlog2.pop %v1951
        %v1953 = vmul.f32 %v1952, 0.6931472
        %v1954 = vmul.f32 -0.5, %v1488
        %v1955 = vadd.f32 %v1954, 1.0
        %v1956 = vmul.f32 %v1955, %v1488
        %v1957 = vand.u32 2147483647, %v1488
        %vm1958 = vcmp.lt.f32.partialorder %v1957, 0.0004427343
        %v1959 = vsel %vm1958, %v1956, %v1953
        %v1960 = vadd.f32 %v1490, 1.0
        %v1961 = vlog2.pop %v1960
        %v1962 = vmul.f32 %v1961, 0.6931472
        %v1963 = vmul.f32 -0.5, %v1490
        %v1964 = vadd.f32 %v1963, 1.0
        %v1965 = vmul.f32 %v1964, %v1490
        %v1966 = vand.u32 2147483647, %v1490
        %vm1967 = vcmp.lt.f32.partialorder %v1966, 0.0004427343
        %v1968 = vsel %vm1967, %v1965, %v1962
        %v1969 = vadd.f32 %v1492, 1.0
        %v1970 = vlog2.pop %v1969
        %v1971 = vmul.f32 %v1970, 0.6931472
        %v1972 = vmul.f32 -0.5, %v1492
        %v1973 = vadd.f32 %v1972, 1.0
        %v1974 = vmul.f32 %v1973, %v1492
        %v1975 = vand.u32 2147483647, %v1492
        %vm1976 = vcmp.lt.f32.partialorder %v1975, 0.0004427343
        %v1977 = vsel %vm1976, %v1974, %v1971
        %v1978 = vadd.f32 %v1494, 1.0
        %v1979 = vlog2.pop %v1978
        %v1980 = vmul.f32 %v1979, 0.6931472
        %v1981 = vmul.f32 -0.5, %v1494
        %v1982 = vadd.f32 %v1981, 1.0
        %v1983 = vmul.f32 %v1982, %v1494
        %v1984 = vand.u32 2147483647, %v1494
        %vm1985 = vcmp.lt.f32.partialorder %v1984, 0.0004427343
        %v1986 = vsel %vm1985, %v1983, %v1980
        %v1987 = vadd.f32 %v1496, 1.0
        %v1988 = vlog2.pop %v1987
        %v1989 = vmul.f32 %v1988, 0.6931472
        %v1990 = vmul.f32 -0.5, %v1496
        %v1991 = vadd.f32 %v1990, 1.0
        %v1992 = vmul.f32 %v1991, %v1496
        %v1993 = vand.u32 2147483647, %v1496
        %vm1994 = vcmp.lt.f32.partialorder %v1993, 0.0004427343
        %v1995 = vsel %vm1994, %v1992, %v1989
        %v1996 = vadd.f32 %v1498, 1.0
        %v1997 = vlog2.pop %v1996
        %v1998 = vmul.f32 %v1997, 0.6931472
        %v1999 = vmul.f32 -0.5, %v1498
        %v2000 = vadd.f32 %v1999, 1.0
        %v2001 = vmul.f32 %v2000, %v1498
        %v2002 = vand.u32 2147483647, %v1498
        %vm2003 = vcmp.lt.f32.partialorder %v2002, 0.0004427343
        %v2004 = vsel %vm2003, %v2001, %v1998
        %v2005 = vadd.f32 %v1500, 1.0
        %v2006 = vlog2.pop %v2005
        %v2007 = vmul.f32 %v2006, 0.6931472
        %v2008 = vmul.f32 -0.5, %v1500
        %v2009 = vadd.f32 %v2008, 1.0
        %v2010 = vmul.f32 %v2009, %v1500
        %v2011 = vand.u32 2147483647, %v1500
        %vm2012 = vcmp.lt.f32.partialorder %v2011, 0.0004427343
        %v2013 = vsel %vm2012, %v2010, %v2007
        %v2014 = vadd.f32 %v1502, 1.0
        %v2015 = vlog2.pop %v2014
        %v2016 = vmul.f32 %v2015, 0.6931472
        %v2017 = vmul.f32 -0.5, %v1502
        %v2018 = vadd.f32 %v2017, 1.0
        %v2019 = vmul.f32 %v2018, %v1502
        %v2020 = vand.u32 2147483647, %v1502
        %vm2021 = vcmp.lt.f32.partialorder %v2020, 0.0004427343
        %v2022 = vsel %vm2021, %v2019, %v2016
        %v2023 = vadd.f32 %v1504, 1.0
        %v2024 = vlog2.pop %v2023
        %v2025 = vmul.f32 %v2024, 0.6931472
        %v2026 = vmul.f32 -0.5, %v1504
        %v2027 = vadd.f32 %v2026, 1.0
        %v2028 = vmul.f32 %v2027, %v1504
        %v2029 = vand.u32 2147483647, %v1504
        %vm2030 = vcmp.lt.f32.partialorder %v2029, 0.0004427343
        %v2031 = vsel %vm2030, %v2028, %v2025
        %v2032 = vadd.f32 %v1506, 1.0
        %v2033 = vlog2.pop %v2032
        %v2034 = vmul.f32 %v2033, 0.6931472
        %v2035 = vmul.f32 -0.5, %v1506
        %v2036 = vadd.f32 %v2035, 1.0
        %v2037 = vmul.f32 %v2036, %v1506
        %v2038 = vand.u32 2147483647, %v1506
        %vm2039 = vcmp.lt.f32.partialorder %v2038, 0.0004427343
        %v2040 = vsel %vm2039, %v2037, %v2034
        %v2041 = vadd.f32 %v1508, 1.0
        %v2042 = vlog2.pop %v2041
        %v2043 = vmul.f32 %v2042, 0.6931472
        %v2044 = vmul.f32 -0.5, %v1508
        %v2045 = vadd.f32 %v2044, 1.0
        %v2046 = vmul.f32 %v2045, %v1508
        %v2047 = vand.u32 2147483647, %v1508
        %vm2048 = vcmp.lt.f32.partialorder %v2047, 0.0004427343
        %v2049 = vsel %vm2048, %v2046, %v2043
        %v2050 = vadd.f32 %v1510, 1.0
        %v2051 = vlog2.pop %v2050
        %v2052 = vmul.f32 %v2051, 0.6931472
        %v2053 = vmul.f32 -0.5, %v1510
        %v2054 = vadd.f32 %v2053, 1.0
        %v2055 = vmul.f32 %v2054, %v1510
        %v2056 = vand.u32 2147483647, %v1510
        %vm2057 = vcmp.lt.f32.partialorder %v2056, 0.0004427343
        %v2058 = vsel %vm2057, %v2055, %v2052
        %v2059 = vadd.f32 %v1512, 1.0
        %v2060 = vlog2.pop %v2059
        %v2061 = vmul.f32 %v2060, 0.6931472
        %v2062 = vmul.f32 -0.5, %v1512
        %v2063 = vadd.f32 %v2062, 1.0
        %v2064 = vmul.f32 %v2063, %v1512
        %v2065 = vand.u32 2147483647, %v1512
        %vm2066 = vcmp.lt.f32.partialorder %v2065, 0.0004427343
        %v2067 = vsel %vm2066, %v2064, %v2061
        %v2068 = vadd.f32 %v1514, 1.0
        %v2069 = vlog2.pop %v2068
        %v2070 = vmul.f32 %v2069, 0.6931472
        %v2071 = vmul.f32 -0.5, %v1514
        %v2072 = vadd.f32 %v2071, 1.0
        %v2073 = vmul.f32 %v2072, %v1514
        %v2074 = vand.u32 2147483647, %v1514
        %vm2075 = vcmp.lt.f32.partialorder %v2074, 0.0004427343
        %v2076 = vsel %vm2075, %v2073, %v2070
        %v2077 = vadd.f32 %v1516, 1.0
        %v2078 = vlog2.pop %v2077
        %v2079 = vmul.f32 %v2078, 0.6931472
        %v2080 = vmul.f32 -0.5, %v1516
        %v2081 = vadd.f32 %v2080, 1.0
        %v2082 = vmul.f32 %v2081, %v1516
        %v2083 = vand.u32 2147483647, %v1516
        %vm2084 = vcmp.lt.f32.partialorder %v2083, 0.0004427343
        %v2085 = vsel %vm2084, %v2082, %v2079
        %v2086 = vadd.f32 %v1518, 1.0
        %v2087 = vlog2.pop %v2086
        %v2088 = vmul.f32 %v2087, 0.6931472
        %v2089 = vmul.f32 -0.5, %v1518
        %v2090 = vadd.f32 %v2089, 1.0
        %v2091 = vmul.f32 %v2090, %v1518
        %v2092 = vand.u32 2147483647, %v1518
        %vm2093 = vcmp.lt.f32.partialorder %v2092, 0.0004427343
        %v2094 = vsel %vm2093, %v2091, %v2088
        %v2095 = vmax.f32 %v833, 0.0
        %v2096 = vmax.f32 %v834, 0.0
        %v2097 = vmax.f32 %v835, 0.0
        %v2098 = vmax.f32 %v836, 0.0
        %v2099 = vmax.f32 %v837, 0.0
        %v2100 = vmax.f32 %v838, 0.0
        %v2101 = vmax.f32 %v839, 0.0
        %v2102 = vmax.f32 %v840, 0.0
        %v2103 = vmax.f32 %v841, 0.0
        %v2104 = vmax.f32 %v842, 0.0
        %v2105 = vmax.f32 %v843, 0.0
        %v2106 = vmax.f32 %v844, 0.0
        %v2107 = vmax.f32 %v845, 0.0
        %v2108 = vmax.f32 %v846, 0.0
        %v2109 = vmax.f32 %v847, 0.0
        %v2110 = vmax.f32 %v848, 0.0
        %v2111 = vmax.f32 %v849, 0.0
        %v2112 = vmax.f32 %v850, 0.0
        %v2113 = vmax.f32 %v851, 0.0
        %v2114 = vmax.f32 %v852, 0.0
        %v2115 = vmax.f32 %v853, 0.0
        %v2116 = vmax.f32 %v854, 0.0
        %v2117 = vmax.f32 %v855, 0.0
        %v2118 = vmax.f32 %v856, 0.0
        %v2119 = vmax.f32 %v857, 0.0
        %v2120 = vmax.f32 %v858, 0.0
        %v2121 = vmax.f32 %v859, 0.0
        %v2122 = vmax.f32 %v860, 0.0
        %v2123 = vmax.f32 %v861, 0.0
        %v2124 = vmax.f32 %v862, 0.0
        %v2125 = vmax.f32 %v863, 0.0
        %v2126 = vmax.f32 %v864, 0.0
        %v2127 = vmax.f32 %v865, 0.0
        %v2128 = vmax.f32 %v866, 0.0
        %v2129 = vmax.f32 %v867, 0.0
        %v2130 = vmax.f32 %v868, 0.0
        %v2131 = vmax.f32 %v869, 0.0
        %v2132 = vmax.f32 %v870, 0.0
        %v2133 = vmax.f32 %v871, 0.0
        %v2134 = vmax.f32 %v872, 0.0
        %v2135 = vmax.f32 %v873, 0.0
        %v2136 = vmax.f32 %v874, 0.0
        %v2137 = vmax.f32 %v875, 0.0
        %v2138 = vmax.f32 %v876, 0.0
        %v2139 = vmax.f32 %v877, 0.0
        %v2140 = vmax.f32 %v878, 0.0
        %v2141 = vmax.f32 %v879, 0.0
        %v2142 = vmax.f32 %v880, 0.0
        %v2143 = vmax.f32 %v881, 0.0
        %v2144 = vmax.f32 %v882, 0.0
        %v2145 = vmax.f32 %v883, 0.0
        %v2146 = vmax.f32 %v884, 0.0
        %v2147 = vmax.f32 %v885, 0.0
        %v2148 = vmax.f32 %v886, 0.0
        %v2149 = vmax.f32 %v887, 0.0
        %v2150 = vmax.f32 %v888, 0.0
        %v2151 = vmax.f32 %v889, 0.0
        %v2152 = vmax.f32 %v890, 0.0
        %v2153 = vmax.f32 %v891, 0.0
        %v2154 = vmax.f32 %v892, 0.0
        %v2155 = vmax.f32 %v893, 0.0
        %v2156 = vmax.f32 %v894, 0.0
        %v2157 = vmax.f32 %v895, 0.0
        %v2158 = vmax.f32 %v896, 0.0
        %v2159 = vadd.f32 %v1527, %v2095
        %v2160 = vadd.f32 %v1536, %v2096
        %v2161 = vadd.f32 %v1545, %v2097
        %v2162 = vadd.f32 %v1554, %v2098
        %v2163 = vadd.f32 %v1563, %v2099
        %v2164 = vadd.f32 %v1572, %v2100
        %v2165 = vadd.f32 %v1581, %v2101
        %v2166 = vadd.f32 %v1590, %v2102
        %v2167 = vadd.f32 %v1599, %v2103
        %v2168 = vadd.f32 %v1608, %v2104
        %v2169 = vadd.f32 %v1617, %v2105
        %v2170 = vadd.f32 %v1626, %v2106
        %v2171 = vadd.f32 %v1635, %v2107
        %v2172 = vadd.f32 %v1644, %v2108
        %v2173 = vadd.f32 %v1653, %v2109
        %v2174 = vadd.f32 %v1662, %v2110
        %v2175 = vadd.f32 %v1671, %v2111
        %v2176 = vadd.f32 %v1680, %v2112
        %v2177 = vadd.f32 %v1689, %v2113
        %v2178 = vadd.f32 %v1698, %v2114
        %v2179 = vadd.f32 %v1707, %v2115
        %v2180 = vadd.f32 %v1716, %v2116
        %v2181 = vadd.f32 %v1725, %v2117
        %v2182 = vadd.f32 %v1734, %v2118
        %v2183 = vadd.f32 %v1743, %v2119
        %v2184 = vadd.f32 %v1752, %v2120
        %v2185 = vadd.f32 %v1761, %v2121
        %v2186 = vadd.f32 %v1770, %v2122
        %v2187 = vadd.f32 %v1779, %v2123
        %v2188 = vadd.f32 %v1788, %v2124
        %v2189 = vadd.f32 %v1797, %v2125
        %v2190 = vadd.f32 %v1806, %v2126
        %v2191 = vadd.f32 %v1815, %v2127
        %v2192 = vadd.f32 %v1824, %v2128
        %v2193 = vadd.f32 %v1833, %v2129
        %v2194 = vadd.f32 %v1842, %v2130
        %v2195 = vadd.f32 %v1851, %v2131
        %v2196 = vadd.f32 %v1860, %v2132
        %v2197 = vadd.f32 %v1869, %v2133
        %v2198 = vadd.f32 %v1878, %v2134
        %v2199 = vadd.f32 %v1887, %v2135
        %v2200 = vadd.f32 %v1896, %v2136
        %v2201 = vadd.f32 %v1905, %v2137
        %v2202 = vadd.f32 %v1914, %v2138
        %v2203 = vadd.f32 %v1923, %v2139
        %v2204 = vadd.f32 %v1932, %v2140
        %v2205 = vadd.f32 %v1941, %v2141
        %v2206 = vadd.f32 %v1950, %v2142
        %v2207 = vadd.f32 %v1959, %v2143
        %v2208 = vadd.f32 %v1968, %v2144
        %v2209 = vadd.f32 %v1977, %v2145
        %v2210 = vadd.f32 %v1986, %v2146
        %v2211 = vadd.f32 %v1995, %v2147
        %v2212 = vadd.f32 %v2004, %v2148
        %v2213 = vadd.f32 %v2013, %v2149
        %v2214 = vadd.f32 %v2022, %v2150
        %v2215 = vadd.f32 %v2031, %v2151
        %v2216 = vadd.f32 %v2040, %v2152
        %v2217 = vadd.f32 %v2049, %v2153
        %v2218 = vadd.f32 %v2058, %v2154
        %v2219 = vadd.f32 %v2067, %v2155
        %v2220 = vadd.f32 %v2076, %v2156
        %v2221 = vadd.f32 %v2085, %v2157
        %v2222 = vadd.f32 %v2094, %v2158
        %vm2223 = vcmp.gt.f32.partialorder %v1105, 0.0
        %vm2224 = vcmp.gt.f32.partialorder %v1107, 0.0
        %vm2225 = vcmp.gt.f32.partialorder %v1109, 0.0
        %vm2226 = vcmp.gt.f32.partialorder %v1111, 0.0
        %vm2227 = vcmp.gt.f32.partialorder %v1115, 0.0
        %vm2228 = vcmp.gt.f32.partialorder %v1117, 0.0
        %vm2229 = vcmp.gt.f32.partialorder %v1119, 0.0
        %vm2230 = vcmp.gt.f32.partialorder %v1121, 0.0
        %vm2231 = vcmp.gt.f32.partialorder %v1125, 0.0
        %vm2232 = vcmp.gt.f32.partialorder %v1127, 0.0
        %vm2233 = vcmp.gt.f32.partialorder %v1129, 0.0
        %vm2234 = vcmp.gt.f32.partialorder %v1131, 0.0
        %vm2235 = vcmp.gt.f32.partialorder %v1135, 0.0
        %vm2236 = vcmp.gt.f32.partialorder %v1137, 0.0
        %vm2237 = vcmp.gt.f32.partialorder %v1139, 0.0
        %vm2238 = vcmp.gt.f32.partialorder %v1141, 0.0
        %vm2239 = vcmp.gt.f32.partialorder %v1145, 0.0
        %vm2240 = vcmp.gt.f32.partialorder %v1147, 0.0
        %vm2241 = vcmp.gt.f32.partialorder %v1149, 0.0
        %vm2242 = vcmp.gt.f32.partialorder %v1151, 0.0
        %vm2243 = vcmp.gt.f32.partialorder %v1155, 0.0
        %vm2244 = vcmp.gt.f32.partialorder %v1157, 0.0
        %vm2245 = vcmp.gt.f32.partialorder %v1159, 0.0
        %vm2246 = vcmp.gt.f32.partialorder %v1161, 0.0
        %vm2247 = vcmp.gt.f32.partialorder %v1165, 0.0
        %vm2248 = vcmp.gt.f32.partialorder %v1167, 0.0
        %vm2249 = vcmp.gt.f32.partialorder %v1169, 0.0
        %vm2250 = vcmp.gt.f32.partialorder %v1171, 0.0
        %vm2251 = vcmp.gt.f32.partialorder %v1175, 0.0
        %vm2252 = vcmp.gt.f32.partialorder %v1177, 0.0
        %vm2253 = vcmp.gt.f32.partialorder %v1179, 0.0
        %vm2254 = vcmp.gt.f32.partialorder %v1181, 0.0
        %vm2255 = vcmp.gt.f32.partialorder %v1185, 0.0
        %vm2256 = vcmp.gt.f32.partialorder %v1187, 0.0
        %vm2257 = vcmp.gt.f32.partialorder %v1189, 0.0
        %vm2258 = vcmp.gt.f32.partialorder %v1191, 0.0
        %vm2259 = vcmp.gt.f32.partialorder %v1195, 0.0
        %vm2260 = vcmp.gt.f32.partialorder %v1197, 0.0
        %vm2261 = vcmp.gt.f32.partialorder %v1199, 0.0
        %vm2262 = vcmp.gt.f32.partialorder %v1201, 0.0
        %vm2263 = vcmp.gt.f32.partialorder %v1205, 0.0
        %vm2264 = vcmp.gt.f32.partialorder %v1207, 0.0
        %vm2265 = vcmp.gt.f32.partialorder %v1209, 0.0
        %vm2266 = vcmp.gt.f32.partialorder %v1211, 0.0
        %vm2267 = vcmp.gt.f32.partialorder %v1215, 0.0
        %vm2268 = vcmp.gt.f32.partialorder %v1217, 0.0
        %vm2269 = vcmp.gt.f32.partialorder %v1219, 0.0
        %vm2270 = vcmp.gt.f32.partialorder %v1221, 0.0
        %vm2271 = vcmp.gt.f32.partialorder %v1225, 0.0
        %vm2272 = vcmp.gt.f32.partialorder %v1227, 0.0
        %vm2273 = vcmp.gt.f32.partialorder %v1229, 0.0
        %vm2274 = vcmp.gt.f32.partialorder %v1231, 0.0
        %vm2275 = vcmp.gt.f32.partialorder %v1235, 0.0
        %vm2276 = vcmp.gt.f32.partialorder %v1237, 0.0
        %vm2277 = vcmp.gt.f32.partialorder %v1239, 0.0
        %vm2278 = vcmp.gt.f32.partialorder %v1241, 0.0
        %vm2279 = vcmp.gt.f32.partialorder %v1245, 0.0
        %vm2280 = vcmp.gt.f32.partialorder %v1247, 0.0
        %vm2281 = vcmp.gt.f32.partialorder %v1249, 0.0
        %vm2282 = vcmp.gt.f32.partialorder %v1251, 0.0
        %vm2283 = vcmp.gt.f32.partialorder %v1255, 0.0
        %vm2284 = vcmp.gt.f32.partialorder %v1257, 0.0
        %vm2285 = vcmp.gt.f32.partialorder %v1259, 0.0
        %vm2286 = vcmp.gt.f32.partialorder %v1261, 0.0
        %v2287 = vsel %vm2223, %v833, 0.0
        %v2288 = vsel %vm2224, %v834, 0.0
        %v2289 = vsel %vm2225, %v835, 0.0
        %v2290 = vsel %vm2226, %v836, 0.0
        %v2291 = vsel %vm2227, %v837, 0.0
        %v2292 = vsel %vm2228, %v838, 0.0
        %v2293 = vsel %vm2229, %v839, 0.0
        %v2294 = vsel %vm2230, %v840, 0.0
        %v2295 = vsel %vm2231, %v841, 0.0
        %v2296 = vsel %vm2232, %v842, 0.0
        %v2297 = vsel %vm2233, %v843, 0.0
        %v2298 = vsel %vm2234, %v844, 0.0
        %v2299 = vsel %vm2235, %v845, 0.0
        %v2300 = vsel %vm2236, %v846, 0.0
        %v2301 = vsel %vm2237, %v847, 0.0
        %v2302 = vsel %vm2238, %v848, 0.0
        %v2303 = vsel %vm2239, %v849, 0.0
        %v2304 = vsel %vm2240, %v850, 0.0
        %v2305 = vsel %vm2241, %v851, 0.0
        %v2306 = vsel %vm2242, %v852, 0.0
        %v2307 = vsel %vm2243, %v853, 0.0
        %v2308 = vsel %vm2244, %v854, 0.0
        %v2309 = vsel %vm2245, %v855, 0.0
        %v2310 = vsel %vm2246, %v856, 0.0
        %v2311 = vsel %vm2247, %v857, 0.0
        %v2312 = vsel %vm2248, %v858, 0.0
        %v2313 = vsel %vm2249, %v859, 0.0
        %v2314 = vsel %vm2250, %v860, 0.0
        %v2315 = vsel %vm2251, %v861, 0.0
        %v2316 = vsel %vm2252, %v862, 0.0
        %v2317 = vsel %vm2253, %v863, 0.0
        %v2318 = vsel %vm2254, %v864, 0.0
        %v2319 = vsel %vm2255, %v865, 0.0
        %v2320 = vsel %vm2256, %v866, 0.0
        %v2321 = vsel %vm2257, %v867, 0.0
        %v2322 = vsel %vm2258, %v868, 0.0
        %v2323 = vsel %vm2259, %v869, 0.0
        %v2324 = vsel %vm2260, %v870, 0.0
        %v2325 = vsel %vm2261, %v871, 0.0
        %v2326 = vsel %vm2262, %v872, 0.0
        %v2327 = vsel %vm2263, %v873, 0.0
        %v2328 = vsel %vm2264, %v874, 0.0
        %v2329 = vsel %vm2265, %v875, 0.0
        %v2330 = vsel %vm2266, %v876, 0.0
        %v2331 = vsel %vm2267, %v877, 0.0
        %v2332 = vsel %vm2268, %v878, 0.0
        %v2333 = vsel %vm2269, %v879, 0.0
        %v2334 = vsel %vm2270, %v880, 0.0
        %v2335 = vsel %vm2271, %v881, 0.0
        %v2336 = vsel %vm2272, %v882, 0.0
        %v2337 = vsel %vm2273, %v883, 0.0
        %v2338 = vsel %vm2274, %v884, 0.0
        %v2339 = vsel %vm2275, %v885, 0.0
        %v2340 = vsel %vm2276, %v886, 0.0
        %v2341 = vsel %vm2277, %v887, 0.0
        %v2342 = vsel %vm2278, %v888, 0.0
        %v2343 = vsel %vm2279, %v889, 0.0
        %v2344 = vsel %vm2280, %v890, 0.0
        %v2345 = vsel %vm2281, %v891, 0.0
        %v2346 = vsel %vm2282, %v892, 0.0
        %v2347 = vsel %vm2283, %v893, 0.0
        %v2348 = vsel %vm2284, %v894, 0.0
        %v2349 = vsel %vm2285, %v895, 0.0
        %v2350 = vsel %vm2286, %v896, 0.0
        %v2351 = vsub.f32 %v2159, %v2287
        %v2352 = vsub.f32 %v2160, %v2288
        %v2353 = vsub.f32 %v2161, %v2289
        %v2354 = vsub.f32 %v2162, %v2290
        %v2355 = vsub.f32 %v2163, %v2291
        %v2356 = vsub.f32 %v2164, %v2292
        %v2357 = vsub.f32 %v2165, %v2293
        %v2358 = vsub.f32 %v2166, %v2294
        %v2359 = vsub.f32 %v2167, %v2295
        %v2360 = vsub.f32 %v2168, %v2296
        %v2361 = vsub.f32 %v2169, %v2297
        %v2362 = vsub.f32 %v2170, %v2298
        %v2363 = vsub.f32 %v2171, %v2299
        %v2364 = vsub.f32 %v2172, %v2300
        %v2365 = vsub.f32 %v2173, %v2301
        %v2366 = vsub.f32 %v2174, %v2302
        %v2367 = vsub.f32 %v2175, %v2303
        %v2368 = vsub.f32 %v2176, %v2304
        %v2369 = vsub.f32 %v2177, %v2305
        %v2370 = vsub.f32 %v2178, %v2306
        %v2371 = vsub.f32 %v2179, %v2307
        %v2372 = vsub.f32 %v2180, %v2308
        %v2373 = vsub.f32 %v2181, %v2309
        %v2374 = vsub.f32 %v2182, %v2310
        %v2375 = vsub.f32 %v2183, %v2311
        %v2376 = vsub.f32 %v2184, %v2312
        %v2377 = vsub.f32 %v2185, %v2313
        %v2378 = vsub.f32 %v2186, %v2314
        %v2379 = vsub.f32 %v2187, %v2315
        %v2380 = vsub.f32 %v2188, %v2316
        %v2381 = vsub.f32 %v2189, %v2317
        %v2382 = vsub.f32 %v2190, %v2318
        %v2383 = vsub.f32 %v2191, %v2319
        %v2384 = vsub.f32 %v2192, %v2320
        %v2385 = vsub.f32 %v2193, %v2321
        %v2386 = vsub.f32 %v2194, %v2322
        %v2387 = vsub.f32 %v2195, %v2323
        %v2388 = vsub.f32 %v2196, %v2324
        %v2389 = vsub.f32 %v2197, %v2325
        %v2390 = vsub.f32 %v2198, %v2326
        %v2391 = vsub.f32 %v2199, %v2327
        %v2392 = vsub.f32 %v2200, %v2328
        %v2393 = vsub.f32 %v2201, %v2329
        %v2394 = vsub.f32 %v2202, %v2330
        %v2395 = vsub.f32 %v2203, %v2331
        %v2396 = vsub.f32 %v2204, %v2332
        %v2397 = vsub.f32 %v2205, %v2333
        %v2398 = vsub.f32 %v2206, %v2334
        %v2399 = vsub.f32 %v2207, %v2335
        %v2400 = vsub.f32 %v2208, %v2336
        %v2401 = vsub.f32 %v2209, %v2337
        %v2402 = vsub.f32 %v2210, %v2338
        %v2403 = vsub.f32 %v2211, %v2339
        %v2404 = vsub.f32 %v2212, %v2340
        %v2405 = vsub.f32 %v2213, %v2341
        %v2406 = vsub.f32 %v2214, %v2342
        %v2407 = vsub.f32 %v2215, %v2343
        %v2408 = vsub.f32 %v2216, %v2344
        %v2409 = vsub.f32 %v2217, %v2345
        %v2410 = vsub.f32 %v2218, %v2346
        %v2411 = vsub.f32 %v2219, %v2347
        %v2412 = vsub.f32 %v2220, %v2348
        %v2413 = vsub.f32 %v2221, %v2349
        %v2414 = vsub.f32 %v2222, %v2350
        %s2415 = smul.u32 %s39, 2
        %s2416 = sadd.s32 %s2415, %s40
        %s2417 = sld [smem:[#allocation6 + %s2416]]
        %s2418 = scvt.s32.f32 %s2417
        %v2419 = vld [vmem:[#allocation2] sm:$0x3]
        %v2420 = vadd.f32 %v2351, %v2353
        %v2421 = vadd.f32 %v2420, %v2355
        %v2422 = vadd.f32 %v2421, %v2357
        %v2423 = vadd.f32 %v2422, %v2359
        %v2424 = vadd.f32 %v2423, %v2361
        %v2425 = vadd.f32 %v2424, %v2363
        %v2426 = vadd.f32 %v2425, %v2365
        %v2427 = vadd.f32 %v2426, %v2367
        %v2428 = vadd.f32 %v2427, %v2369
        %v2429 = vadd.f32 %v2428, %v2371
        %v2430 = vadd.f32 %v2429, %v2373
        %v2431 = vadd.f32 %v2430, %v2375
        %v2432 = vadd.f32 %v2431, %v2377
        %v2433 = vadd.f32 %v2432, %v2379
        %v2434 = vadd.f32 %v2433, %v2381
        %v2435 = vadd.f32 %v2434, %v2383
        %v2436 = vadd.f32 %v2435, %v2385
        %v2437 = vadd.f32 %v2436, %v2387
        %v2438 = vadd.f32 %v2437, %v2389
        %v2439 = vadd.f32 %v2438, %v2391
        %v2440 = vadd.f32 %v2439, %v2393
        %v2441 = vadd.f32 %v2440, %v2395
        %v2442 = vadd.f32 %v2441, %v2397
        %v2443 = vadd.f32 %v2442, %v2399
        %v2444 = vadd.f32 %v2443, %v2401
        %v2445 = vadd.f32 %v2444, %v2403
        %v2446 = vadd.f32 %v2445, %v2405
        %v2447 = vadd.f32 %v2446, %v2407
        %v2448 = vadd.f32 %v2447, %v2409
        %v2449 = vadd.f32 %v2448, %v2411
        %v2450 = vadd.f32 %v2449, %v2413
        %v2451 = vrot.slane %v2450, 4
        %v2452 = vadd.f32 %v2450, %v2451
        %v2453 = vrot.slane %v2452, 2
        %v2454 = vadd.f32 %v2452, %v2453
        %v2455 = vrot.slane %v2454, 1
        %v2456 = vadd.f32 %v2454, %v2455
        %v2457 = vadd.f32 %v2352, %v2354
        %v2458 = vadd.f32 %v2457, %v2356
        %v2459 = vadd.f32 %v2458, %v2358
        %v2460 = vadd.f32 %v2459, %v2360
        %v2461 = vadd.f32 %v2460, %v2362
        %v2462 = vadd.f32 %v2461, %v2364
        %v2463 = vadd.f32 %v2462, %v2366
        %v2464 = vadd.f32 %v2463, %v2368
        %v2465 = vadd.f32 %v2464, %v2370
        %v2466 = vadd.f32 %v2465, %v2372
        %v2467 = vadd.f32 %v2466, %v2374
        %v2468 = vadd.f32 %v2467, %v2376
        %v2469 = vadd.f32 %v2468, %v2378
        %v2470 = vadd.f32 %v2469, %v2380
        %v2471 = vadd.f32 %v2470, %v2382
        %v2472 = vadd.f32 %v2471, %v2384
        %v2473 = vadd.f32 %v2472, %v2386
        %v2474 = vadd.f32 %v2473, %v2388
        %v2475 = vadd.f32 %v2474, %v2390
        %v2476 = vadd.f32 %v2475, %v2392
        %v2477 = vadd.f32 %v2476, %v2394
        %v2478 = vadd.f32 %v2477, %v2396
        %v2479 = vadd.f32 %v2478, %v2398
        %v2480 = vadd.f32 %v2479, %v2400
        %v2481 = vadd.f32 %v2480, %v2402
        %v2482 = vadd.f32 %v2481, %v2404
        %v2483 = vadd.f32 %v2482, %v2406
        %v2484 = vadd.f32 %v2483, %v2408
        %v2485 = vadd.f32 %v2484, %v2410
        %v2486 = vadd.f32 %v2485, %v2412
        %v2487 = vadd.f32 %v2486, %v2414
        %v2488 = vrot.slane %v2487, 4
        %v2489 = vadd.f32 %v2487, %v2488
        %v2490 = vrot.slane %v2489, 2
        %v2491 = vadd.f32 %v2489, %v2490
        %v2492 = vrot.slane %v2491, 1
        %v2493 = vadd.f32 %v2491, %v2492
        %v2494 = vstv %s2418
        %v2495 = vmul.f32 %v2456, %v2494
        %v2496 = vmul.f32 %v2493, %v2494
        %v2499 = vcombine.low %v2495, %v2496
        %v2501 = vunpack.c.l.s4 1966171168
        %v2502 = vunpack.c.0.s8 %v2501
        %v2503 = vlaneseq
        %v2504 = vshrl.u32 %v2503, 7
        %v2505 = vsub.s32 %v2502, %v2504
        %v2506 = vrot.slane %v2499, %v2505
        %v2508 = vunpack.c.l.s4 1966171168
        %v2509 = vunpack.c.0.s8 %v2508
        %v2510 = vlaneseq
        %v2511 = vshrl.u32 %v2510, 7
        %v2512 = vsub.s32 %v2509, %v2511
        %v2513 = vrot.slane %v2506, %v2512
        %v2515 = vadd.f32 %v2419, %v2513
        %v2516 = vlaneseq
        %vm2517 = vcmp.ge.s32.totalorder %v2516, 0
        %vm2518 = vcmp.lt.s32.totalorder %v2516, 256
        %vm2519 = vmand %vm2517, %vm2518
        %2520 = vst.msk [vmem:[#allocation2] sm:$0x3] %vm2519, %v2515
        %p2521 = scmp.eq.s32.totalorder %s40, 1
        // Predicated region
        $region117: #{tpu_custom_call.1} parent=103 // pred_check
          %p2522 = pneg %p2521
        $region118: #{tpu_custom_call.1} parent=103 // pred_check_branch
          %2524 = sbr.rel (%p2522) target = $region120
        $region119: #{tpu_custom_call.1} parent=103 // pred_region
          %v2525 = vld [vmem:[#allocation2] sm:$0x3]
          %v2527 = vlaneseq
          %v2528 = vshrl.u32 %v2527, 7
          %v2529 = vsub.s32 0, %v2528
          %v2530 = vrot.slane %v2525, %v2529
          %v2531 = vlaneseq
          %v2532 = vshrl.u32 %v2531, 7
          %v2533 = vsub.s32 1, %v2532
          %v2534 = vrot.slane %v2525, %v2533
          %vm2537 = vcmask 1040384
          %v2538 = vsel %vm2537, %v2530, 0.0
          %v2539 = vsel %vm2537, %v2534, 0.0
          %v2540 = vadd.f32 %v2538, %v2539
          %2541 = vadd.xlane.f32.xlu0 %v2540
          %v2542 = vpop.xlane.xlu0 %2541
          %v2543 = vrot.slane %v2542, 4
          %v2544 = vadd.f32 %v2542, %v2543
          %v2545 = vrot.slane %v2544, 2
          %v2546 = vadd.f32 %v2544, %v2545
          %v2547 = vrot.slane %v2546, 1
          %v2548 = vadd.f32 %v2546, %v2547
          %s2549 = vtos %v2548
          %v2550 = vstv %s2549
          %2551 = vst [vmem:[%s412] sm:$0xff] %v2550
        $region120: #{tpu_custom_call.1} parent=103 // pred_fallthru
          _
        %s2552 = sand.u32 %s183, 1
        %s2553 = scalar_lea.sflag [#allocation10], %s2552
        %s2554 = sand.u32 %s183, 1
        %s2555 = smul.addr %s2554, 8
        %s2556 = scalar_lea.vmem [#allocation9], %s2555
        // Predicated region
        $region121: #{tpu_custom_call.1} parent=103 // pred_check
          %p2557 = pneg %p193
        $region122: #{tpu_custom_call.1} parent=103 // pred_check_branch
          %2559 = sbr.rel (%p2557) target = $region124
        $region123: #{tpu_custom_call.1} parent=103 // pred_region
          %s2561 = ssub.s32 128, 128
          %2562 = vsyncadd %s2553, %s2561
          %s2563 = smul.addr %s39, 128
          %s2564 = scalar_lea.hbm %s7, %s2563
          %s2566 = sshll.u32 %s2556, 4
          %s2567 = int_to_ptr.vmem [resolvable:$true] %s2566
          %2569 = dma.vmem_to_hbm [thread:$0]  %s2567, 128, %s2564, %s2553
        $region124: #{tpu_custom_call.1} parent=103 // pred_fallthru
          _
      $region104: #{tpu_custom_call.1} parent=5 // pred_fallthru
        _
      %p2570 = scmp.le.s32.totalorder 2, %s30
      // Predicated region
      $region125: #{tpu_custom_call.1} parent=5 // pred_check
        %p2571 = pneg %p2570
      $region126: #{tpu_custom_call.1} parent=5 // pred_check_branch
        %2573 = sbr.rel (%p2571) target = $region128
      $region127: #{tpu_custom_call.1} parent=5 // pred_region
        %s2574 = ssub.s32 %s30, 2
        // Predicated region
        $region129: #{tpu_custom_call.1} parent=127 // pred_check
          %p2575 = pneg %p199
        $region130: #{tpu_custom_call.1} parent=127 // pred_check_branch
          %2577 = sbr.rel (%p2575) target = $region132
        $region131: #{tpu_custom_call.1} parent=127 // pred_region
          %s2578 = sand.u32 %s184, 1
          %s2579 = scalar_lea.sflag [#allocation10], %s2578
          %s2580 = sand.u32 %s184, 1
          %s2581 = smul.addr %s2580, 8
          %s2582 = scalar_lea.vmem [#allocation9], %s2581
          %2583 = dma.done %s2579, 128
        $region132: #{tpu_custom_call.1} parent=127 // pred_fallthru
          _
      $region128: #{tpu_custom_call.1} parent=5 // pred_fallthru
        _
    $region6: #{tpu_custom_call.1} parent=1 // loop_footer
      %s34 = sadd.s32 1, %s30
    $region7: #{tpu_custom_call.1} parent=1 // loop_footer_branch
      %29 = sbr.rel target = $region3
    $region8: #{tpu_custom_call.1} parent=1 // loop_exit
      _
    %2584 = vsyncpa [#allocation10], 1
    %s2585 = scalar_lea.sflag [#allocation10], 1
    %2586 = vsyncpa %s2585, 1

</llo_original>
